<compile_context>
chip_gen: v7x
topology: tpu7x:2x2x1
jax: 0.10.0
libtpu: 0.0.40
codegen_flags: <defaults>
</compile_context>

<pallas_src>
import functools

import jax
import jax.numpy as jnp
from jax.experimental import pallas as pl
from jax.experimental.pallas import tpu as pltpu


def _leaky_relu(x, slope=0.2):
    # max-form: 2 VPU ops instead of compare+select (equivalent only for 0 < slope < 1).
    return jnp.maximum(x, slope * x)


def _round_up(x, m):
    return (x + m - 1) // m * m


def scvae_kernel(
    x_ref, eps_ref,
    w1_ref, b1_ref, w2_ref, b2_ref,
    wmv_ref, bmv_ref,
    w3p_ref, b3_ref, w4_ref, b4_ref,
    xhat_ref, mlv_ref,
    *, latent_dim,
):
    bf16 = jnp.bfloat16

    # ---- encoder: Linear -> LeakyReLU(0.2) -> Linear -> LeakyReLU(0.2) ----
    x = x_ref[...].astype(bf16)  # no-op cast when x already arrives in bf16
    h = jnp.dot(x, w1_ref[...], preferred_element_type=jnp.float32) + b1_ref[...]
    h = _leaky_relu(h).astype(bf16)
    h = jnp.dot(h, w2_ref[...], preferred_element_type=jnp.float32) + b2_ref[...]
    h = _leaky_relu(h).astype(bf16)

    # ---- fused mean/logvar heads: one lane-dense N = 2*latent matmul ----
    mlv = jnp.dot(h, wmv_ref[...], preferred_element_type=jnp.float32) + bmv_ref[...]

    # ---- reparameterization on the packed tile (no sub-vreg lane slices) ----
    # After the roll, lanes [0, L) hold exp(0.5*logvar) = std; lanes [L, 2L) hold
    # exp(0.5*mean), which is multiplied by the zero-padded half of eps and then by the
    # zero rows of w3p, so it never affects the result.
    std_rolled = pltpu.roll(jnp.exp(0.5 * mlv), shift=latent_dim, axis=1)
    z_full = (mlv + std_rolled * eps_ref[...]).astype(bf16)  # == [z | logvar]

    # ---- decoder: Linear -> LeakyReLU(0.2) -> Linear -> ReLU ----
    d = jnp.dot(z_full, w3p_ref[...], preferred_element_type=jnp.float32) + b3_ref[...]
    d = _leaky_relu(d).astype(bf16)
    xh = jnp.dot(d, w4_ref[...], preferred_element_type=jnp.float32) + b4_ref[...]

    xhat_ref[...] = jnp.maximum(xh, 0.0).astype(xhat_ref.dtype)   # bf16 store (lane-dense)
    mlv_ref[...] = mlv  # packed [mean | logvar], single 128-lane-dense f32 store


def scvae_forward(x, eps, kparams, *, tile_b=256, vmem_limit_bytes=48 * 1024 * 1024):
    """Full scVAE forward in a single pallas_call, tiled over batch.

    tile_b: rows per grid step.  256 fills the v6e/v7x MXU (use 128 on v5e); keep the
    grid length >= 2 on v7x so both TensorCores get work.  The batch is padded up to a
    multiple of the tile; padded rows are discarded.
    kparams: output of prepare_params() (packed wmv/bmv, zero-padded w3p) -- precomputed
    once so no per-call concatenates are issued.
    """
    B, input_dim = x.shape
    hidden_dim = kparams["w1"].shape[1]
    latent_dim = kparams["w2"].shape[1]
    assert eps.shape == (B, latent_dim)

    tile_b = min(tile_b, _round_up(B, 8))
    Bp = _round_up(B, tile_b)
    if Bp != B:
        x = jnp.pad(x, ((0, Bp - B), (0, 0)))
    # Zero-pad eps lanes to 2*latent so the reparameterization runs on the packed tile.
    eps = jnp.pad(eps.astype(jnp.float32), ((0, Bp - B), (0, latent_dim)))

    grid = (Bp // tile_b,)

    def wspec(shape):
        # Grid-invariant (constant index_map) -> fetched once, kept resident.
        # Buffered(1): no point double-buffering a constant block; halves weight VMEM.
        return pl.BlockSpec(shape, lambda i: (0,) * len(shape),
                            pipeline_mode=pl.Buffered(1))

    in_specs = [
        pl.BlockSpec((tile_b, input_dim), lambda i: (i, 0)),               # x (bf16)
        pl.BlockSpec((tile_b, 2 * latent_dim), lambda i: (i, 0)),          # eps (padded)
        wspec((input_dim, hidden_dim)), wspec((1, hidden_dim)),            # w1, b1
        wspec((hidden_dim, latent_dim)), wspec((1, latent_dim)),           # w2, b2
        wspec((latent_dim, 2 * latent_dim)), wspec((1, 2 * latent_dim)),   # wmv, bmv
        wspec((2 * latent_dim, hidden_dim)), wspec((1, hidden_dim)),       # w3p, b3
        wspec((hidden_dim, input_dim)), wspec((1, input_dim)),             # w4, b4
    ]
    out_specs = [
        pl.BlockSpec((tile_b, input_dim), lambda i: (i, 0)),               # x_hat (bf16)
        pl.BlockSpec((tile_b, 2 * latent_dim), lambda i: (i, 0)),          # [mean|logvar]
    ]
    out_shape = (
        jax.ShapeDtypeStruct((Bp, input_dim), x.dtype),                    # bf16 IO
        jax.ShapeDtypeStruct((Bp, 2 * latent_dim), jnp.float32),
    )

    # Advisory cost estimate (updated for bf16 x / x_hat IO).
    io_itemsize = jnp.dtype(x.dtype).itemsize
    mm_terms = (input_dim * hidden_dim + hidden_dim * latent_dim
                + latent_dim * 2 * latent_dim + 2 * latent_dim * hidden_dim
                + hidden_dim * input_dim)
    weight_bytes = 2 * mm_terms + 4 * (2 * hidden_dim + 3 * latent_dim + input_dim)
    io_bytes = Bp * (2 * io_itemsize * input_dim + 4 * 4 * latent_dim)
    cost = pl.CostEstimate(
        flops=2 * Bp * mm_terms,
        transcendentals=Bp * 2 * latent_dim,
        bytes_accessed=weight_bytes + io_bytes,
    )

    fn = pl.pallas_call(
        functools.partial(scvae_kernel, latent_dim=latent_dim),
        out_shape=out_shape,
        grid_spec=pltpu.PrefetchScalarGridSpec(
            num_scalar_prefetch=0,
            grid=grid,
            in_specs=in_specs,
            out_specs=out_specs,
        ),
        compiler_params=pltpu.CompilerParams(
            # On v7x, verify in xprof that both TensorCores pick up batch tiles; if not,
            # switch to pltpu.CORE_PARALLEL / an explicit pl.core_map split.
            dimension_semantics=("parallel",),
            vmem_limit_bytes=vmem_limit_bytes,
        ),
        cost_estimate=cost,
    )
    x_hat, mlv = fn(
        x, eps,
        kparams["w1"], kparams["b1"], kparams["w2"], kparams["b2"],
        kparams["wmv"], kparams["bmv"],
        kparams["w3p"], kparams["b3"], kparams["w4"], kparams["b4"],
    )
    return x_hat[:B], mlv[:B, :latent_dim], mlv[:B, latent_dim:]


def init_params(key, input_dim, hidden_dim, latent_dim):
    """PyTorch-Linear-like init; weights pre-transposed to (in, out) and stored in bf16."""
    def linear(k, fan_in, fan_out):
        kw, kb = jax.random.split(k)
        bound = 1.0 / jnp.sqrt(float(fan_in))
        w = jax.random.uniform(kw, (fan_in, fan_out), jnp.float32, -bound, bound)
        b = jax.random.uniform(kb, (1, fan_out), jnp.float32, -bound, bound)
        return w.astype(jnp.bfloat16), b  # bf16 weights (MXU-native), f32 biases

    keys = jax.random.split(key, 6)
    w1, b1 = linear(keys[0], input_dim, hidden_dim)
    w2, b2 = linear(keys[1], hidden_dim, latent_dim)
    wm, bm = linear(keys[2], latent_dim, latent_dim)
    wv, bv = linear(keys[3], latent_dim, latent_dim)
    w3, b3 = linear(keys[4], latent_dim, hidden_dim)
    w4, b4 = linear(keys[5], hidden_dim, input_dim)
    return dict(w1=w1, b1=b1, w2=w2, b2=b2, wm=wm, bm=bm,
                wv=wv, bv=bv, w3=w3, b3=b3, w4=w4, b4=b4)


def prepare_params(params):
    """One-time packing into the kernel layout (do this once, outside the step loop)."""
    wmv = jnp.concatenate([params["wm"], params["wv"]], axis=1)            # (L, 2L) bf16
    bmv = jnp.concatenate([params["bm"], params["bv"]], axis=1)            # (1, 2L) f32
    # Zero rows for the logvar half of the packed z, so dot(z_full, w3p) == dot(z, w3).
    w3p = jnp.concatenate([params["w3"], jnp.zeros_like(params["w3"])], axis=0)  # (2L, H)
    return dict(w1=params["w1"], b1=params["b1"], w2=params["w2"], b2=params["b2"],
                wmv=wmv, bmv=bmv, w3p=w3p, b3=params["b3"],
                w4=params["w4"], b4=params["b4"])


def scvae_reference(x, eps, p):
    """Pure-JAX reference with the same bf16-input / f32-accumulation matmul path."""
    def mm(a, w):
        return jnp.dot(a.astype(jnp.bfloat16), w, preferred_element_type=jnp.float32)

    h = _leaky_relu(mm(x, p["w1"]) + p["b1"])
    h = _leaky_relu(mm(h, p["w2"]) + p["b2"])
    mean = mm(h, p["wm"]) + p["bm"]
    logvar = mm(h, p["wv"]) + p["bv"]
    z = mean + jnp.exp(0.5 * logvar) * eps
    d = _leaky_relu(mm(z, p["w3"]) + p["b3"])
    xh = jnp.maximum(mm(d, p["w4"]) + p["b4"], 0.0)
    return xh, mean, logvar


if __name__ == "__main__":
    # Small shapes consistent with the module (genes=input_dim, hidden, latent).
    # B=512 with tile_b=256 -> a 2-long parallel grid (both v7x TensorCores busy) and
    # 256-row MXU tiles on v6e/v7x.
    B, INPUT_DIM, HIDDEN_DIM, LATENT_DIM = 512, 256, 128, 64

    key = jax.random.PRNGKey(0)
    kx, keps, kp = jax.random.split(key, 3)

    # Synthetic "log1p(counts)" data, stored bf16 upstream (bf16 kernel IO).
    x = jnp.log1p(jax.random.uniform(kx, (B, INPUT_DIM), jnp.float32, 0.0, 10.0))
    x = x.astype(jnp.bfloat16)
    # Reparameterization noise drawn outside the kernel (deterministic).
    eps = jax.random.normal(keps, (B, LATENT_DIM), jnp.float32)

    params = init_params(kp, INPUT_DIM, HIDDEN_DIM, LATENT_DIM)
    kparams = prepare_params(params)  # packed once, reused across calls

    x_hat, mean, logvar = scvae_forward(x, eps, kparams, tile_b=256)
    jax.block_until_ready((x_hat, mean, logvar))

    # Cross-check against a pure-JAX reference of the same math / dtypes.
    ref_xhat, ref_mean, ref_logvar = scvae_reference(x, eps, params)
    assert x_hat.shape == (B, INPUT_DIM) and x_hat.dtype == x.dtype
    assert mean.shape == (B, LATENT_DIM) and logvar.shape == (B, LATENT_DIM)
    assert jnp.allclose(x_hat.astype(jnp.float32),
                        ref_xhat.astype(x_hat.dtype).astype(jnp.float32),
                        atol=2e-2, rtol=2e-2)
    assert jnp.allclose(mean, ref_mean, atol=1e-2, rtol=1e-2)
    assert jnp.allclose(logvar, ref_logvar, atol=1e-2, rtol=1e-2)

    print("KERNEL_OK")
</pallas_src>

<mosaic_0001>
module attributes {stable_mosaic.version = 11 : i64} {
  func.func @scvae_kernel(%arg0: i32, %arg1: memref<256x256xbf16, #tpu.memory_space<vmem>>, %arg2: memref<256x128xf32, #tpu.memory_space<vmem>>, %arg3: memref<256x128xbf16, #tpu.memory_space<vmem>>, %arg4: memref<1x128xf32, #tpu.memory_space<vmem>>, %arg5: memref<128x64xbf16, #tpu.memory_space<vmem>>, %arg6: memref<1x64xf32, #tpu.memory_space<vmem>>, %arg7: memref<64x128xbf16, #tpu.memory_space<vmem>>, %arg8: memref<1x128xf32, #tpu.memory_space<vmem>>, %arg9: memref<128x128xbf16, #tpu.memory_space<vmem>>, %arg10: memref<1x128xf32, #tpu.memory_space<vmem>>, %arg11: memref<128x256xbf16, #tpu.memory_space<vmem>>, %arg12: memref<1x256xf32, #tpu.memory_space<vmem>>, %arg13: memref<256x256xbf16, #tpu.memory_space<vmem>>, %arg14: memref<256x128xf32, #tpu.memory_space<vmem>>) attributes {dimension_semantics = [#tpu.dimension_semantics<parallel>], iteration_bounds = array<i64: 2>, scalar_prefetch = 0 : i64, scratch_operands = 0 : i64, tpu.core_type = #tpu.core_type<tc>, window_params = [{transform_indices = @transform_0, window_bounds = array<i64: 256, 256>}, {transform_indices = @transform_1, window_bounds = array<i64: 256, 128>}, {pipeline_mode = #tpu.pipeline_mode<synchronous>, transform_indices = @transform_2, window_bounds = array<i64: 256, 128>}, {pipeline_mode = #tpu.pipeline_mode<synchronous>, transform_indices = @transform_3, window_bounds = array<i64: 1, 128>}, {pipeline_mode = #tpu.pipeline_mode<synchronous>, transform_indices = @transform_4, window_bounds = array<i64: 128, 64>}, {pipeline_mode = #tpu.pipeline_mode<synchronous>, transform_indices = @transform_5, window_bounds = array<i64: 1, 64>}, {pipeline_mode = #tpu.pipeline_mode<synchronous>, transform_indices = @transform_6, window_bounds = array<i64: 64, 128>}, {pipeline_mode = #tpu.pipeline_mode<synchronous>, transform_indices = @transform_7, window_bounds = array<i64: 1, 128>}, {pipeline_mode = #tpu.pipeline_mode<synchronous>, transform_indices = @transform_8, window_bounds = array<i64: 128, 128>}, {pipeline_mode = #tpu.pipeline_mode<synchronous>, transform_indices = @transform_9, window_bounds = array<i64: 1, 128>}, {pipeline_mode = #tpu.pipeline_mode<synchronous>, transform_indices = @transform_10, window_bounds = array<i64: 128, 256>}, {pipeline_mode = #tpu.pipeline_mode<synchronous>, transform_indices = @transform_11, window_bounds = array<i64: 1, 256>}, {transform_indices = @transform_12, window_bounds = array<i64: 256, 256>}, {transform_indices = @transform_13, window_bounds = array<i64: 256, 128>}]} {
    %c0 = arith.constant 0 : index
    %c0_0 = arith.constant 0 : index
    %0 = vector.load %arg1[%c0, %c0_0] : memref<256x256xbf16, #tpu.memory_space<vmem>>, vector<256x256xbf16>
    %c0_1 = arith.constant 0 : index
    %c0_2 = arith.constant 0 : index
    %1 = vector.load %arg3[%c0_1, %c0_2] : memref<256x128xbf16, #tpu.memory_space<vmem>>, vector<256x128xbf16>
    %cst = arith.constant dense<0.000000e+00> : vector<256x128xf32>
    %2 = tpu.matmul %0, %1, %cst {dimension_numbers = #tpu.dot_dimension_numbers<[1], [0], [0], [1], [0, 0, 1, 1], [], []>} : vector<256x256xbf16>, vector<256x128xbf16>, vector<256x128xf32> -> vector<256x128xf32>
    %c0_3 = arith.constant 0 : index
    %c0_4 = arith.constant 0 : index
    %3 = vector.load %arg4[%c0_3, %c0_4] : memref<1x128xf32, #tpu.memory_space<vmem>>, vector<1x128xf32>
    %4 = vector.broadcast %3 : vector<1x128xf32> to vector<256x128xf32>
    %5 = arith.addf %2, %4 : vector<256x128xf32>
    %cst_5 = arith.constant 2.000000e-01 : f32
    %6 = vector.broadcast %cst_5 : f32 to vector<256x128xf32>
    %7 = arith.mulf %6, %5 : vector<256x128xf32>
    %8 = arith.maximumf %5, %7 : vector<256x128xf32>
    %9 = arith.truncf %8 : vector<256x128xf32> to vector<256x128xbf16>
    %c0_6 = arith.constant 0 : index
    %c0_7 = arith.constant 0 : index
    %10 = vector.load %arg5[%c0_6, %c0_7] : memref<128x64xbf16, #tpu.memory_space<vmem>>, vector<128x64xbf16>
    %cst_8 = arith.constant dense<0.000000e+00> : vector<256x64xf32>
    %11 = tpu.matmul %9, %10, %cst_8 {dimension_numbers = #tpu.dot_dimension_numbers<[1], [0], [0], [1], [0, 0, 1, 1], [], []>} : vector<256x128xbf16>, vector<128x64xbf16>, vector<256x64xf32> -> vector<256x64xf32>
    %c0_9 = arith.constant 0 : index
    %c0_10 = arith.constant 0 : index
    %12 = vector.load %arg6[%c0_9, %c0_10] : memref<1x64xf32, #tpu.memory_space<vmem>>, vector<1x64xf32>
    %13 = vector.broadcast %12 : vector<1x64xf32> to vector<256x64xf32>
    %14 = arith.addf %11, %13 : vector<256x64xf32>
    %cst_11 = arith.constant 2.000000e-01 : f32
    %15 = vector.broadcast %cst_11 : f32 to vector<256x64xf32>
    %16 = arith.mulf %15, %14 : vector<256x64xf32>
    %17 = arith.maximumf %14, %16 : vector<256x64xf32>
    %18 = arith.truncf %17 : vector<256x64xf32> to vector<256x64xbf16>
    %c0_12 = arith.constant 0 : index
    %c0_13 = arith.constant 0 : index
    %19 = vector.load %arg7[%c0_12, %c0_13] : memref<64x128xbf16, #tpu.memory_space<vmem>>, vector<64x128xbf16>
    %cst_14 = arith.constant dense<0.000000e+00> : vector<256x128xf32>
    %20 = tpu.matmul %18, %19, %cst_14 {dimension_numbers = #tpu.dot_dimension_numbers<[1], [0], [0], [1], [0, 0, 1, 1], [], []>} : vector<256x64xbf16>, vector<64x128xbf16>, vector<256x128xf32> -> vector<256x128xf32>
    %c0_15 = arith.constant 0 : index
    %c0_16 = arith.constant 0 : index
    %21 = vector.load %arg8[%c0_15, %c0_16] : memref<1x128xf32, #tpu.memory_space<vmem>>, vector<1x128xf32>
    %22 = vector.broadcast %21 : vector<1x128xf32> to vector<256x128xf32>
    %23 = arith.addf %20, %22 : vector<256x128xf32>
    %cst_17 = arith.constant 5.000000e-01 : f32
    %24 = vector.broadcast %cst_17 : f32 to vector<256x128xf32>
    %25 = arith.mulf %24, %23 : vector<256x128xf32>
    %26 = math.exp %25 : vector<256x128xf32>
    %c64_i32 = arith.constant 64 : i32
    %27 = tpu.dynamic_rotate %26 by %c64_i32 dim 1 : vector<256x128xf32>, i32 -> vector<256x128xf32>
    %c0_18 = arith.constant 0 : index
    %c0_19 = arith.constant 0 : index
    %28 = vector.load %arg2[%c0_18, %c0_19] : memref<256x128xf32, #tpu.memory_space<vmem>>, vector<256x128xf32>
    %29 = arith.mulf %27, %28 : vector<256x128xf32>
    %30 = arith.addf %23, %29 : vector<256x128xf32>
    %31 = arith.truncf %30 : vector<256x128xf32> to vector<256x128xbf16>
    %c0_20 = arith.constant 0 : index
    %c0_21 = arith.constant 0 : index
    %32 = vector.load %arg9[%c0_20, %c0_21] : memref<128x128xbf16, #tpu.memory_space<vmem>>, vector<128x128xbf16>
    %cst_22 = arith.constant dense<0.000000e+00> : vector<256x128xf32>
    %33 = tpu.matmul %31, %32, %cst_22 {dimension_numbers = #tpu.dot_dimension_numbers<[1], [0], [0], [1], [0, 0, 1, 1], [], []>} : vector<256x128xbf16>, vector<128x128xbf16>, vector<256x128xf32> -> vector<256x128xf32>
    %c0_23 = arith.constant 0 : index
    %c0_24 = arith.constant 0 : index
    %34 = vector.load %arg10[%c0_23, %c0_24] : memref<1x128xf32, #tpu.memory_space<vmem>>, vector<1x128xf32>
    %35 = vector.broadcast %34 : vector<1x128xf32> to vector<256x128xf32>
    %36 = arith.addf %33, %35 : vector<256x128xf32>
    %cst_25 = arith.constant 2.000000e-01 : f32
    %37 = vector.broadcast %cst_25 : f32 to vector<256x128xf32>
    %38 = arith.mulf %37, %36 : vector<256x128xf32>
    %39 = arith.maximumf %36, %38 : vector<256x128xf32>
    %40 = arith.truncf %39 : vector<256x128xf32> to vector<256x128xbf16>
    %c0_26 = arith.constant 0 : index
    %c0_27 = arith.constant 0 : index
    %41 = vector.load %arg11[%c0_26, %c0_27] : memref<128x256xbf16, #tpu.memory_space<vmem>>, vector<128x256xbf16>
    %cst_28 = arith.constant dense<0.000000e+00> : vector<256x256xf32>
    %42 = tpu.matmul %40, %41, %cst_28 {dimension_numbers = #tpu.dot_dimension_numbers<[1], [0], [0], [1], [0, 0, 1, 1], [], []>} : vector<256x128xbf16>, vector<128x256xbf16>, vector<256x256xf32> -> vector<256x256xf32>
    %c0_29 = arith.constant 0 : index
    %c0_30 = arith.constant 0 : index
    %43 = vector.load %arg12[%c0_29, %c0_30] : memref<1x256xf32, #tpu.memory_space<vmem>>, vector<1x256xf32>
    %44 = vector.broadcast %43 : vector<1x256xf32> to vector<256x256xf32>
    %45 = arith.addf %42, %44 : vector<256x256xf32>
    %cst_31 = arith.constant 0.000000e+00 : f32
    %46 = vector.broadcast %cst_31 : f32 to vector<256x256xf32>
    %47 = arith.maximumf %45, %46 : vector<256x256xf32>
    %48 = arith.truncf %47 : vector<256x256xf32> to vector<256x256xbf16>
    %c0_32 = arith.constant 0 : index
    %c0_33 = arith.constant 0 : index
    %49 = vector.load %arg13[%c0_32, %c0_33] : memref<256x256xbf16, #tpu.memory_space<vmem>>, vector<256x256xbf16>
    tpu.vector_store %arg13[%c0_32, %c0_33], %48 {strides = array<i32>} : memref<256x256xbf16, #tpu.memory_space<vmem>>, vector<256x256xbf16>,
    %c0_34 = arith.constant 0 : index
    %c0_35 = arith.constant 0 : index
    %50 = vector.load %arg14[%c0_34, %c0_35] : memref<256x128xf32, #tpu.memory_space<vmem>>, vector<256x128xf32>
    tpu.vector_store %arg14[%c0_34, %c0_35], %23 {strides = array<i32>} : memref<256x128xf32, #tpu.memory_space<vmem>>, vector<256x128xf32>,
    return
  }
  func.func @transform_0(%arg0: i32) -> (i32, i32) {
    %c0_i32 = arith.constant 0 : i32
    %c0_i32_0 = arith.constant 0 : i32
    return %arg0, %c0_i32 : i32, i32
  }
  func.func @transform_1(%arg0: i32) -> (i32, i32) {
    %c0_i32 = arith.constant 0 : i32
    %c0_i32_0 = arith.constant 0 : i32
    return %arg0, %c0_i32 : i32, i32
  }
  func.func @transform_2(%arg0: i32) -> (i32, i32) {
    %c0_i32 = arith.constant 0 : i32
    %c0_i32_0 = arith.constant 0 : i32
    %c0_i32_1 = arith.constant 0 : i32
    return %c0_i32, %c0_i32_0 : i32, i32
  }
  func.func @transform_3(%arg0: i32) -> (i32, i32) {
    %c0_i32 = arith.constant 0 : i32
    %c0_i32_0 = arith.constant 0 : i32
    %c0_i32_1 = arith.constant 0 : i32
    return %c0_i32, %c0_i32_0 : i32, i32
  }
  func.func @transform_4(%arg0: i32) -> (i32, i32) {
    %c0_i32 = arith.constant 0 : i32
    %c0_i32_0 = arith.constant 0 : i32
    %c0_i32_1 = arith.constant 0 : i32
    return %c0_i32, %c0_i32_0 : i32, i32
  }
  func.func @transform_5(%arg0: i32) -> (i32, i32) {
    %c0_i32 = arith.constant 0 : i32
    %c0_i32_0 = arith.constant 0 : i32
    %c0_i32_1 = arith.constant 0 : i32
    return %c0_i32, %c0_i32_0 : i32, i32
  }
  func.func @transform_6(%arg0: i32) -> (i32, i32) {
    %c0_i32 = arith.constant 0 : i32
    %c0_i32_0 = arith.constant 0 : i32
    %c0_i32_1 = arith.constant 0 : i32
    return %c0_i32, %c0_i32_0 : i32, i32
  }
  func.func @transform_7(%arg0: i32) -> (i32, i32) {
    %c0_i32 = arith.constant 0 : i32
    %c0_i32_0 = arith.constant 0 : i32
    %c0_i32_1 = arith.constant 0 : i32
    return %c0_i32, %c0_i32_0 : i32, i32
  }
  func.func @transform_8(%arg0: i32) -> (i32, i32) {
    %c0_i32 = arith.constant 0 : i32
    %c0_i32_0 = arith.constant 0 : i32
    %c0_i32_1 = arith.constant 0 : i32
    return %c0_i32, %c0_i32_0 : i32, i32
  }
  func.func @transform_9(%arg0: i32) -> (i32, i32) {
    %c0_i32 = arith.constant 0 : i32
    %c0_i32_0 = arith.constant 0 : i32
    %c0_i32_1 = arith.constant 0 : i32
    return %c0_i32, %c0_i32_0 : i32, i32
  }
  func.func @transform_10(%arg0: i32) -> (i32, i32) {
    %c0_i32 = arith.constant 0 : i32
    %c0_i32_0 = arith.constant 0 : i32
    %c0_i32_1 = arith.constant 0 : i32
    return %c0_i32, %c0_i32_0 : i32, i32
  }
  func.func @transform_11(%arg0: i32) -> (i32, i32) {
    %c0_i32 = arith.constant 0 : i32
    %c0_i32_0 = arith.constant 0 : i32
    %c0_i32_1 = arith.constant 0 : i32
    return %c0_i32, %c0_i32_0 : i32, i32
  }
  func.func @transform_12(%arg0: i32) -> (i32, i32) {
    %c0_i32 = arith.constant 0 : i32
    %c0_i32_0 = arith.constant 0 : i32
    return %arg0, %c0_i32 : i32, i32
  }
  func.func @transform_13(%arg0: i32) -> (i32, i32) {
    %c0_i32 = arith.constant 0 : i32
    %c0_i32_0 = arith.constant 0 : i32
    return %arg0, %c0_i32 : i32, i32
  }
}

</mosaic_0001>

<llo_original>
// kernel: tpu_custom_call.1
$region0: #{tpu_custom_call.1}
  #allocation0 [shape = 'u32[]', space=smem, size = 0x4, offset = 0x4, fixed_abs, tag = 'smem constant byte address 0x4 - core index']
  #allocation1 [shape = 'u32[144,128]{1,0:T(1,128)}', space=vmem, size = 0x12000, scoped, tag = 'internal scratch']
  %s0 = inlined_call_operand.hbm [shape: bf16[512,256], index: 0, kind: input, shape index: {}]
  %s1 = inlined_call_operand.hbm [shape: f32[512,128], index: 1, kind: input, shape index: {}]
  %s2 = inlined_call_operand.hbm [shape: bf16[256,128], index: 2, kind: input, shape index: {}]
  %s3 = inlined_call_operand.vmem [shape: f32[1,128], index: 3, kind: input, shape index: {}]
  %s4 = inlined_call_operand.vmem [shape: bf16[128,64], index: 4, kind: input, shape index: {}]
  %s5 = inlined_call_operand.vmem [shape: f32[1,64], index: 5, kind: input, shape index: {}]
  %s6 = inlined_call_operand.hbm [shape: bf16[64,128], index: 6, kind: input, shape index: {}]
  %s7 = inlined_call_operand.vmem [shape: f32[1,128], index: 7, kind: input, shape index: {}]
  %s8 = inlined_call_operand.hbm [shape: bf16[128,128], index: 8, kind: input, shape index: {}]
  %s9 = inlined_call_operand.hbm [shape: f32[1,128], index: 9, kind: input, shape index: {}]
  %s10 = inlined_call_operand.vmem [shape: bf16[128,256], index: 10, kind: input, shape index: {}]
  %s11 = inlined_call_operand.vmem [shape: f32[1,256], index: 11, kind: input, shape index: {}]
  %s12 = inlined_call_operand.hbm [shape: bf16[512,256], index: 12, kind: output, shape index: {0}]
  %s13 = inlined_call_operand.hbm [shape: f32[512,128], index: 13, kind: output, shape index: {1}]
  %14 = xla_tuple %s12, %s13
  %s15 = sld [smem:[#allocation0]]
  $region113: #{tpu_custom_call.1} parent=0
    _
  %s17 = ssub.s32 1, %s15
  %s18 = scalar_select 0, %s17, %s15
  $region1: #{tpu_custom_call.1} parent=0
    #allocation2 [shape = 'u8[262144]{0}', space=vmem, size = 0x40000, scoped, tag = 'input window, operand 0']
    #allocation3 [shape = 's32[2]{0}', space=sflag, size = 0x8, scoped, tag = 'scoped memory for tpu_custom_call.1']
    #allocation4 [shape = 's32[2]{0}', space=sflag, size = 0x8, scoped, tag = 'scoped memory for tpu_custom_call.1']
    #allocation5 [shape = 'u8[262144]{0}', space=vmem, size = 0x40000, scoped, tag = 'input window, operand 1']
    #allocation6 [shape = 's32[2]{0}', space=sflag, size = 0x8, scoped, tag = 'scoped memory for tpu_custom_call.1']
    #allocation7 [shape = 'u8[65536]{0}', space=vmem, size = 0x10000, scoped, tag = 'input window, operand 2, single buffered']
    #allocation8 [shape = 'u8[16384]{0}', space=vmem, size = 0x4000, scoped, tag = 'input window, operand 6, single buffered']
    #allocation9 [shape = 's32[1]{0}', space=sflag, size = 0x4, scoped, tag = 'scoped memory for tpu_custom_call.1']
    #allocation10 [shape = 'u8[32768]{0}', space=vmem, size = 0x8000, scoped, tag = 'input window, operand 8, single buffered']
    #allocation11 [shape = 'u8[512]{0}', space=vmem, size = 0x400, scoped, tag = 'input window, operand 9, single buffered']
    #allocation12 [shape = 's32[1]{0}', space=sflag, size = 0x4, scoped, tag = 'scoped memory for tpu_custom_call.1']
    #allocation13 [shape = 'u8[262144]{0}', space=vmem, size = 0x40000, scoped, tag = 'output window, operand 0']
    #allocation14 [shape = 'u8[262144]{0}', space=vmem, size = 0x40000, scoped, tag = 'output window, operand 1']
    #allocation15 [shape = 's32[2]{0}', space=sflag, size = 0x8, scoped, tag = 'scoped memory for tpu_custom_call.1']
    %19 = vsyncpa [#allocation3], 0
    %s20 = scalar_lea.sflag [#allocation3], 1
    %21 = vsyncpa %s20, 0
    %22 = vsyncpa [#allocation6], 0
    %s23 = scalar_lea.sflag [#allocation6], 1
    %24 = vsyncpa %s23, 0
    %25 = vsyncpa [#allocation9], 0
    %26 = vsyncpa [#allocation12], 0
    %27 = vsyncpa [#allocation4], 0
    %s28 = scalar_lea.sflag [#allocation4], 1
    %29 = vsyncpa %s28, 0
    %30 = vsyncpa [#allocation15], 0
    %s31 = scalar_lea.sflag [#allocation15], 1
    %32 = vsyncpa %s31, 0
    loop: start=0, step=1, limit=4
    $region2: #{tpu_custom_call.1} parent=1 // loop_pre_header
      _
    $region3: #{tpu_custom_call.1} parent=1 // loop_header
      %s34 = sphi 0, %s38
      %p35 = scmp.ge.s32.totalorder %s34, 4
      %s44 = sphi 0, %s46
      %s47 = sphi 0, %s44
      %s48 = sphi 0, %s47
      %s64 = sphi 0, %s48
      %s70 = sphi 0, %s72
      %s73 = sphi 0, %s70
      %s74 = sphi 0, %s73
      %s90 = sphi 0, %s74
      %s94 = sphi 0, %s94
      %s96 = sphi 0, %s94
      %s97 = sphi 0, %s96
      %s111 = sphi 0, %s97
      %s115 = sphi 0, %s115
      %s117 = sphi 0, %s115
      %s118 = sphi 0, %s117
      %s132 = sphi 0, %s118
      %s136 = sphi 0, %s136
      %s138 = sphi 0, %s136
      %s139 = sphi 0, %s138
      %s153 = sphi 0, %s139
      %s157 = sphi 0, %s157
      %s159 = sphi 0, %s157
      %s160 = sphi 0, %s159
      %s174 = sphi 0, %s160
      %s178 = sphi 0, %s178
      %s180 = sphi 0, %s178
      %s181 = sphi 0, %s180
      %s195 = sphi 0, %s181
      %s199 = sphi 0, %s199
      %s201 = sphi 0, %s199
      %s202 = sphi 0, %s201
      %s216 = sphi 0, %s202
      %s220 = sphi 0, %s220
      %s222 = sphi 0, %s220
      %s223 = sphi 0, %s222
      %s237 = sphi 0, %s223
      %s241 = sphi 0, %s241
      %s243 = sphi 0, %s241
      %s244 = sphi 0, %s243
      %s258 = sphi 0, %s244
      %s262 = sphi 0, %s262
      %s264 = sphi 0, %s262
      %s265 = sphi 0, %s264
      %s279 = sphi 0, %s265
      %s283 = sphi 0, %s283
      %s285 = sphi 0, %s283
      %s286 = sphi 0, %s285
      %s300 = sphi 0, %s286
      %s306 = sphi 0, %s308
      %s309 = sphi 0, %s306
      %s310 = sphi 0, %s309
      %s326 = sphi 0, %s310
      %s332 = sphi 0, %s334
      %s335 = sphi 0, %s332
      %s336 = sphi 0, %s335
      %s352 = sphi 0, %s336
    $region4: #{tpu_custom_call.1} parent=1 // loop_header_branch
      %37 = sbr.rel (%p35) target = $region8
    $region5: #{tpu_custom_call.1} parent=1 // loop_body
      %s39 = ssub.s32 %s34, 1
      %s40 = ssub.s32 %s34, 2
      %s41 = sadd.s32 %s34, 1
      %s42 = ssub.s32 %s34, %s41
      %p43 = scmp.eq.s32.totalorder %s42, 0
      %s45 = sadd.s32 %s44, 1
      %s46 = scalar_select %p43, %s44, %s45
      %p49 = pneg %p43
      %p50 = scmp.eq.s32.totalorder %s34, 1
      %p51 = por %p49, %p50
      %p52 = scmp.ne.s32.totalorder %s44, %s47
      %p53 = scmp.eq.s32.totalorder %s34, 0
      %p54 = por %p52, %p53
      %p55 = scmp.ne.s32.totalorder %s44, %s47
      %p56 = scmp.eq.s32.totalorder %s39, 1
      %p57 = por %p55, %p56
      %p58 = scmp.ne.s32.totalorder %s47, %s48
      %p59 = scmp.eq.s32.totalorder %s39, 0
      %p60 = por %p58, %p59
      %p61 = scmp.ne.s32.totalorder %s47, %s48
      %p62 = scmp.eq.s32.totalorder %s40, 1
      %p63 = por %p61, %p62
      %p65 = scmp.ne.s32.totalorder %s48, %s64
      %p66 = scmp.eq.s32.totalorder %s40, 0
      %p67 = por %p65, %p66
      %s68 = ssub.s32 %s34, %s41
      %p69 = scmp.eq.s32.totalorder %s68, 0
      %s71 = sadd.s32 %s70, 1
      %s72 = scalar_select %p69, %s70, %s71
      %p75 = pneg %p69
      %p76 = scmp.eq.s32.totalorder %s34, 1
      %p77 = por %p75, %p76
      %p78 = scmp.ne.s32.totalorder %s70, %s73
      %p79 = scmp.eq.s32.totalorder %s34, 0
      %p80 = por %p78, %p79
      %p81 = scmp.ne.s32.totalorder %s70, %s73
      %p82 = scmp.eq.s32.totalorder %s39, 1
      %p83 = por %p81, %p82
      %p84 = scmp.ne.s32.totalorder %s73, %s74
      %p85 = scmp.eq.s32.totalorder %s39, 0
      %p86 = por %p84, %p85
      %p87 = scmp.ne.s32.totalorder %s73, %s74
      %p88 = scmp.eq.s32.totalorder %s40, 1
      %p89 = por %p87, %p88
      %p91 = scmp.ne.s32.totalorder %s74, %s90
      %p92 = scmp.eq.s32.totalorder %s40, 0
      %p93 = por %p91, %p92
      %s95 = sadd.s32 %s94, 1
      %p98 = scmp.eq.s32.totalorder %s34, 1
      %p99 = scmp.ne.s32.totalorder %s94, %s96
      %p100 = scmp.eq.s32.totalorder %s34, 0
      %p101 = por %p99, %p100
      %p102 = scmp.ne.s32.totalorder %s94, %s96
      %p103 = scmp.eq.s32.totalorder %s39, 1
      %p104 = por %p102, %p103
      %p105 = scmp.ne.s32.totalorder %s96, %s97
      %p106 = scmp.eq.s32.totalorder %s39, 0
      %p107 = por %p105, %p106
      %p108 = scmp.ne.s32.totalorder %s96, %s97
      %p109 = scmp.eq.s32.totalorder %s40, 1
      %p110 = por %p108, %p109
      %p112 = scmp.ne.s32.totalorder %s97, %s111
      %p113 = scmp.eq.s32.totalorder %s40, 0
      %p114 = por %p112, %p113
      %s116 = sadd.s32 %s115, 1
      %p119 = scmp.eq.s32.totalorder %s34, 1
      %p120 = scmp.ne.s32.totalorder %s115, %s117
      %p121 = scmp.eq.s32.totalorder %s34, 0
      %p122 = por %p120, %p121
      %p123 = scmp.ne.s32.totalorder %s115, %s117
      %p124 = scmp.eq.s32.totalorder %s39, 1
      %p125 = por %p123, %p124
      %p126 = scmp.ne.s32.totalorder %s117, %s118
      %p127 = scmp.eq.s32.totalorder %s39, 0
      %p128 = por %p126, %p127
      %p129 = scmp.ne.s32.totalorder %s117, %s118
      %p130 = scmp.eq.s32.totalorder %s40, 1
      %p131 = por %p129, %p130
      %p133 = scmp.ne.s32.totalorder %s118, %s132
      %p134 = scmp.eq.s32.totalorder %s40, 0
      %p135 = por %p133, %p134
      %s137 = sadd.s32 %s136, 1
      %p140 = scmp.eq.s32.totalorder %s34, 1
      %p141 = scmp.ne.s32.totalorder %s136, %s138
      %p142 = scmp.eq.s32.totalorder %s34, 0
      %p143 = por %p141, %p142
      %p144 = scmp.ne.s32.totalorder %s136, %s138
      %p145 = scmp.eq.s32.totalorder %s39, 1
      %p146 = por %p144, %p145
      %p147 = scmp.ne.s32.totalorder %s138, %s139
      %p148 = scmp.eq.s32.totalorder %s39, 0
      %p149 = por %p147, %p148
      %p150 = scmp.ne.s32.totalorder %s138, %s139
      %p151 = scmp.eq.s32.totalorder %s40, 1
      %p152 = por %p150, %p151
      %p154 = scmp.ne.s32.totalorder %s139, %s153
      %p155 = scmp.eq.s32.totalorder %s40, 0
      %p156 = por %p154, %p155
      %s158 = sadd.s32 %s157, 1
      %p161 = scmp.eq.s32.totalorder %s34, 1
      %p162 = scmp.ne.s32.totalorder %s157, %s159
      %p163 = scmp.eq.s32.totalorder %s34, 0
      %p164 = por %p162, %p163
      %p165 = scmp.ne.s32.totalorder %s157, %s159
      %p166 = scmp.eq.s32.totalorder %s39, 1
      %p167 = por %p165, %p166
      %p168 = scmp.ne.s32.totalorder %s159, %s160
      %p169 = scmp.eq.s32.totalorder %s39, 0
      %p170 = por %p168, %p169
      %p171 = scmp.ne.s32.totalorder %s159, %s160
      %p172 = scmp.eq.s32.totalorder %s40, 1
      %p173 = por %p171, %p172
      %p175 = scmp.ne.s32.totalorder %s160, %s174
      %p176 = scmp.eq.s32.totalorder %s40, 0
      %p177 = por %p175, %p176
      %s179 = sadd.s32 %s178, 1
      %p182 = scmp.eq.s32.totalorder %s34, 1
      %p183 = scmp.ne.s32.totalorder %s178, %s180
      %p184 = scmp.eq.s32.totalorder %s34, 0
      %p185 = por %p183, %p184
      %p186 = scmp.ne.s32.totalorder %s178, %s180
      %p187 = scmp.eq.s32.totalorder %s39, 1
      %p188 = por %p186, %p187
      %p189 = scmp.ne.s32.totalorder %s180, %s181
      %p190 = scmp.eq.s32.totalorder %s39, 0
      %p191 = por %p189, %p190
      %p192 = scmp.ne.s32.totalorder %s180, %s181
      %p193 = scmp.eq.s32.totalorder %s40, 1
      %p194 = por %p192, %p193
      %p196 = scmp.ne.s32.totalorder %s181, %s195
      %p197 = scmp.eq.s32.totalorder %s40, 0
      %p198 = por %p196, %p197
      %s200 = sadd.s32 %s199, 1
      %p203 = scmp.eq.s32.totalorder %s34, 1
      %p204 = scmp.ne.s32.totalorder %s199, %s201
      %p205 = scmp.eq.s32.totalorder %s34, 0
      %p206 = por %p204, %p205
      %p207 = scmp.ne.s32.totalorder %s199, %s201
      %p208 = scmp.eq.s32.totalorder %s39, 1
      %p209 = por %p207, %p208
      %p210 = scmp.ne.s32.totalorder %s201, %s202
      %p211 = scmp.eq.s32.totalorder %s39, 0
      %p212 = por %p210, %p211
      %p213 = scmp.ne.s32.totalorder %s201, %s202
      %p214 = scmp.eq.s32.totalorder %s40, 1
      %p215 = por %p213, %p214
      %p217 = scmp.ne.s32.totalorder %s202, %s216
      %p218 = scmp.eq.s32.totalorder %s40, 0
      %p219 = por %p217, %p218
      %s221 = sadd.s32 %s220, 1
      %p224 = scmp.eq.s32.totalorder %s34, 1
      %p225 = scmp.ne.s32.totalorder %s220, %s222
      %p226 = scmp.eq.s32.totalorder %s34, 0
      %p227 = por %p225, %p226
      %p228 = scmp.ne.s32.totalorder %s220, %s222
      %p229 = scmp.eq.s32.totalorder %s39, 1
      %p230 = por %p228, %p229
      %p231 = scmp.ne.s32.totalorder %s222, %s223
      %p232 = scmp.eq.s32.totalorder %s39, 0
      %p233 = por %p231, %p232
      %p234 = scmp.ne.s32.totalorder %s222, %s223
      %p235 = scmp.eq.s32.totalorder %s40, 1
      %p236 = por %p234, %p235
      %p238 = scmp.ne.s32.totalorder %s223, %s237
      %p239 = scmp.eq.s32.totalorder %s40, 0
      %p240 = por %p238, %p239
      %s242 = sadd.s32 %s241, 1
      %p245 = scmp.eq.s32.totalorder %s34, 1
      %p246 = scmp.ne.s32.totalorder %s241, %s243
      %p247 = scmp.eq.s32.totalorder %s34, 0
      %p248 = por %p246, %p247
      %p249 = scmp.ne.s32.totalorder %s241, %s243
      %p250 = scmp.eq.s32.totalorder %s39, 1
      %p251 = por %p249, %p250
      %p252 = scmp.ne.s32.totalorder %s243, %s244
      %p253 = scmp.eq.s32.totalorder %s39, 0
      %p254 = por %p252, %p253
      %p255 = scmp.ne.s32.totalorder %s243, %s244
      %p256 = scmp.eq.s32.totalorder %s40, 1
      %p257 = por %p255, %p256
      %p259 = scmp.ne.s32.totalorder %s244, %s258
      %p260 = scmp.eq.s32.totalorder %s40, 0
      %p261 = por %p259, %p260
      %s263 = sadd.s32 %s262, 1
      %p266 = scmp.eq.s32.totalorder %s34, 1
      %p267 = scmp.ne.s32.totalorder %s262, %s264
      %p268 = scmp.eq.s32.totalorder %s34, 0
      %p269 = por %p267, %p268
      %p270 = scmp.ne.s32.totalorder %s262, %s264
      %p271 = scmp.eq.s32.totalorder %s39, 1
      %p272 = por %p270, %p271
      %p273 = scmp.ne.s32.totalorder %s264, %s265
      %p274 = scmp.eq.s32.totalorder %s39, 0
      %p275 = por %p273, %p274
      %p276 = scmp.ne.s32.totalorder %s264, %s265
      %p277 = scmp.eq.s32.totalorder %s40, 1
      %p278 = por %p276, %p277
      %p280 = scmp.ne.s32.totalorder %s265, %s279
      %p281 = scmp.eq.s32.totalorder %s40, 0
      %p282 = por %p280, %p281
      %s284 = sadd.s32 %s283, 1
      %p287 = scmp.eq.s32.totalorder %s34, 1
      %p288 = scmp.ne.s32.totalorder %s283, %s285
      %p289 = scmp.eq.s32.totalorder %s34, 0
      %p290 = por %p288, %p289
      %p291 = scmp.ne.s32.totalorder %s283, %s285
      %p292 = scmp.eq.s32.totalorder %s39, 1
      %p293 = por %p291, %p292
      %p294 = scmp.ne.s32.totalorder %s285, %s286
      %p295 = scmp.eq.s32.totalorder %s39, 0
      %p296 = por %p294, %p295
      %p297 = scmp.ne.s32.totalorder %s285, %s286
      %p298 = scmp.eq.s32.totalorder %s40, 1
      %p299 = por %p297, %p298
      %p301 = scmp.ne.s32.totalorder %s286, %s300
      %p302 = scmp.eq.s32.totalorder %s40, 0
      %p303 = por %p301, %p302
      %s304 = ssub.s32 %s34, %s41
      %p305 = scmp.eq.s32.totalorder %s304, 0
      %s307 = sadd.s32 %s306, 1
      %s308 = scalar_select %p305, %s306, %s307
      %p311 = pneg %p305
      %p312 = scmp.eq.s32.totalorder %s34, 1
      %p313 = por %p311, %p312
      %p314 = scmp.ne.s32.totalorder %s306, %s309
      %p315 = scmp.eq.s32.totalorder %s34, 0
      %p316 = por %p314, %p315
      %p317 = scmp.ne.s32.totalorder %s306, %s309
      %p318 = scmp.eq.s32.totalorder %s39, 1
      %p319 = por %p317, %p318
      %p320 = scmp.ne.s32.totalorder %s309, %s310
      %p321 = scmp.eq.s32.totalorder %s39, 0
      %p322 = por %p320, %p321
      %p323 = scmp.ne.s32.totalorder %s309, %s310
      %p324 = scmp.eq.s32.totalorder %s40, 1
      %p325 = por %p323, %p324
      %p327 = scmp.ne.s32.totalorder %s310, %s326
      %p328 = scmp.eq.s32.totalorder %s40, 0
      %p329 = por %p327, %p328
      %s330 = ssub.s32 %s34, %s41
      %p331 = scmp.eq.s32.totalorder %s330, 0
      %s333 = sadd.s32 %s332, 1
      %s334 = scalar_select %p331, %s332, %s333
      %p337 = pneg %p331
      %p338 = scmp.eq.s32.totalorder %s34, 1
      %p339 = por %p337, %p338
      %p340 = scmp.ne.s32.totalorder %s332, %s335
      %p341 = scmp.eq.s32.totalorder %s34, 0
      %p342 = por %p340, %p341
      %p343 = scmp.ne.s32.totalorder %s332, %s335
      %p344 = scmp.eq.s32.totalorder %s39, 1
      %p345 = por %p343, %p344
      %p346 = scmp.ne.s32.totalorder %s335, %s336
      %p347 = scmp.eq.s32.totalorder %s39, 0
      %p348 = por %p346, %p347
      %p349 = scmp.ne.s32.totalorder %s335, %s336
      %p350 = scmp.eq.s32.totalorder %s40, 1
      %p351 = por %p349, %p350
      %p353 = scmp.ne.s32.totalorder %s336, %s352
      %p354 = scmp.eq.s32.totalorder %s40, 0
      %p355 = por %p353, %p354
      %p356 = scmp.le.s32.totalorder 1, %s34
      %p357 = scmp.lt.s32.totalorder %s34, 3
      %p358 = pnand %p356, %p357
      %p359 = pneg %p358
      // Predicated region
      $region9: #{tpu_custom_call.1} parent=5 // pred_check
        _
      $region10: #{tpu_custom_call.1} parent=5 // pred_check_branch
        %361 = sbr.rel (%p358) target = $region12
      $region11: #{tpu_custom_call.1} parent=5 // pred_region
        %s362 = ssub.s32 %s34, 1
        // Predicated region
        $region13: #{tpu_custom_call.1} parent=11 // pred_check
          %p363 = pneg %p107
        $region14: #{tpu_custom_call.1} parent=11 // pred_check_branch
          %365 = sbr.rel (%p363) target = $region16
        $region15: #{tpu_custom_call.1} parent=11 // pred_region
          %s367 = ssub.s32 2048, 2048
          %368 = vsyncadd [#allocation6], %s367
          %s369 = sshll.u32 [#allocation7], 4
          %s370 = int_to_ptr.vmem [resolvable:$true] %s369
          %375 = dma.hbm_to_vmem [thread:$0]  %s2, 2048, %s370, [#allocation6], 64, 64, 4
        $region16: #{tpu_custom_call.1} parent=11 // pred_fallthru
          _
        // Predicated region
        $region17: #{tpu_custom_call.1} parent=11 // pred_check
          %p376 = pneg %p128
        $region18: #{tpu_custom_call.1} parent=11 // pred_check_branch
          %378 = sbr.rel (%p376) target = $region20
        $region19: #{tpu_custom_call.1} parent=11 // pred_region
          _
        $region20: #{tpu_custom_call.1} parent=11 // pred_fallthru
          _
        // Predicated region
        $region21: #{tpu_custom_call.1} parent=11 // pred_check
          %p379 = pneg %p149
        $region22: #{tpu_custom_call.1} parent=11 // pred_check_branch
          %381 = sbr.rel (%p379) target = $region24
        $region23: #{tpu_custom_call.1} parent=11 // pred_region
          _
        $region24: #{tpu_custom_call.1} parent=11 // pred_fallthru
          _
        // Predicated region
        $region25: #{tpu_custom_call.1} parent=11 // pred_check
          %p382 = pneg %p170
        $region26: #{tpu_custom_call.1} parent=11 // pred_check_branch
          %384 = sbr.rel (%p382) target = $region28
        $region27: #{tpu_custom_call.1} parent=11 // pred_region
          _
        $region28: #{tpu_custom_call.1} parent=11 // pred_fallthru
          _
        // Predicated region
        $region29: #{tpu_custom_call.1} parent=11 // pred_check
          %p385 = pneg %p191
        $region30: #{tpu_custom_call.1} parent=11 // pred_check_branch
          %387 = sbr.rel (%p385) target = $region32
        $region31: #{tpu_custom_call.1} parent=11 // pred_region
          %s389 = ssub.s32 512, 512
          %390 = vsyncadd [#allocation9], %s389
          %s391 = sshll.u32 [#allocation8], 4
          %s392 = int_to_ptr.vmem [resolvable:$true] %s391
          %397 = dma.hbm_to_vmem [thread:$0]  %s6, 512, %s392, [#allocation9], 64, 64, 4
        $region32: #{tpu_custom_call.1} parent=11 // pred_fallthru
          _
        // Predicated region
        $region33: #{tpu_custom_call.1} parent=11 // pred_check
          %p398 = pneg %p212
        $region34: #{tpu_custom_call.1} parent=11 // pred_check_branch
          %400 = sbr.rel (%p398) target = $region36
        $region35: #{tpu_custom_call.1} parent=11 // pred_region
          _
        $region36: #{tpu_custom_call.1} parent=11 // pred_fallthru
          _
        // Predicated region
        $region37: #{tpu_custom_call.1} parent=11 // pred_check
          %p401 = pneg %p233
        $region38: #{tpu_custom_call.1} parent=11 // pred_check_branch
          %403 = sbr.rel (%p401) target = $region40
        $region39: #{tpu_custom_call.1} parent=11 // pred_region
          %s405 = ssub.s32 1024, 1024
          %406 = vsyncadd [#allocation9], %s405
          %s407 = sshll.u32 [#allocation10], 4
          %s408 = int_to_ptr.vmem [resolvable:$true] %s407
          %413 = dma.hbm_to_vmem [thread:$0]  %s8, 1024, %s408, [#allocation9], 64, 64, 4
        $region40: #{tpu_custom_call.1} parent=11 // pred_fallthru
          _
        // Predicated region
        $region41: #{tpu_custom_call.1} parent=11 // pred_check
          %p414 = pneg %p254
        $region42: #{tpu_custom_call.1} parent=11 // pred_check_branch
          %416 = sbr.rel (%p414) target = $region44
        $region43: #{tpu_custom_call.1} parent=11 // pred_region
          %s418 = ssub.s32 16, 16
          %419 = vsyncadd [#allocation12], %s418
          %s421 = sshll.u32 [#allocation11], 4
          %s422 = int_to_ptr.vmem [resolvable:$true] %s421
          %424 = dma.hbm_to_vmem [thread:$0]  %s9, 16, %s422, [#allocation12]
        $region44: #{tpu_custom_call.1} parent=11 // pred_fallthru
          _
        // Predicated region
        $region45: #{tpu_custom_call.1} parent=11 // pred_check
          %p425 = pneg %p275
        $region46: #{tpu_custom_call.1} parent=11 // pred_check_branch
          %427 = sbr.rel (%p425) target = $region48
        $region47: #{tpu_custom_call.1} parent=11 // pred_region
          _
        $region48: #{tpu_custom_call.1} parent=11 // pred_fallthru
          _
        // Predicated region
        $region49: #{tpu_custom_call.1} parent=11 // pred_check
          %p428 = pneg %p296
        $region50: #{tpu_custom_call.1} parent=11 // pred_check_branch
          %430 = sbr.rel (%p428) target = $region52
        $region51: #{tpu_custom_call.1} parent=11 // pred_region
          _
        $region52: #{tpu_custom_call.1} parent=11 // pred_fallthru
          _
      $region12: #{tpu_custom_call.1} parent=5 // pred_fallthru
        _
      %p431 = scmp.lt.s32.totalorder %s34, 2
      // Predicated region
      $region53: #{tpu_custom_call.1} parent=5 // pred_check
        %p432 = pneg %p431
      $region54: #{tpu_custom_call.1} parent=5 // pred_check_branch
        %434 = sbr.rel (%p432) target = $region56
      $region55: #{tpu_custom_call.1} parent=5 // pred_region
        // Predicated region
        $region57: #{tpu_custom_call.1} parent=55 // pred_check
          %p435 = pneg %p54
        $region58: #{tpu_custom_call.1} parent=55 // pred_check_branch
          %437 = sbr.rel (%p435) target = $region60
        $region59: #{tpu_custom_call.1} parent=55 // pred_region
          %s438 = sand.u32 %s44, 1
          %s439 = scalar_lea.sflag [#allocation3], %s438
          %s440 = sand.u32 %s44, 1
          %s441 = smul.addr %s440, 256
          %s442 = scalar_lea.vmem [#allocation2], %s441
          %s443 = smul.u32 32, %s34
          %s445 = ssub.s32 4096, 4096
          %446 = vsyncadd %s439, %s445
          %s447 = smul.addr %s443, 2
          %s448 = smul.addr %s447, 64
          %s449 = scalar_lea.hbm %s0, %s448
          %s450 = sshll.u32 %s442, 4
          %s451 = int_to_ptr.vmem [resolvable:$true] %s450
          %456 = dma.hbm_to_vmem [thread:$0]  %s449, 4096, %s451, %s439, 128, 128, 8
        $region60: #{tpu_custom_call.1} parent=55 // pred_fallthru
          _
        // Predicated region
        $region61: #{tpu_custom_call.1} parent=55 // pred_check
          %p457 = pneg %p80
        $region62: #{tpu_custom_call.1} parent=55 // pred_check_branch
          %459 = sbr.rel (%p457) target = $region64
        $region63: #{tpu_custom_call.1} parent=55 // pred_region
          %s460 = sand.u32 %s34, 1
          %s461 = scalar_lea.sflag [#allocation6], %s460
          %s462 = sand.u32 %s70, 1
          %s463 = smul.addr %s462, 256
          %s464 = scalar_lea.vmem [#allocation5], %s463
          %s465 = smul.u32 32, %s34
          %s467 = ssub.s32 4096, 4096
          %468 = vsyncadd %s461, %s467
          %s469 = smul.addr %s465, 128
          %s470 = scalar_lea.hbm %s1, %s469
          %s471 = sshll.u32 %s464, 4
          %s472 = int_to_ptr.vmem [resolvable:$true] %s471
          %477 = dma.hbm_to_vmem [thread:$0]  %s470, 4096, %s472, %s461, 128, 128, 8
        $region64: #{tpu_custom_call.1} parent=55 // pred_fallthru
          _
      $region56: #{tpu_custom_call.1} parent=5 // pred_fallthru
        _
      %p478 = scmp.le.s32.totalorder 1, %s34
      %p479 = scmp.lt.s32.totalorder %s34, 3
      %p480 = pnand %p478, %p479
      %p481 = pneg %p480
      // Predicated region
      $region65: #{tpu_custom_call.1} parent=5 // pred_check
        _
      $region66: #{tpu_custom_call.1} parent=5 // pred_check_branch
        %483 = sbr.rel (%p480) target = $region68
      $region67: #{tpu_custom_call.1} parent=5 // pred_region
        %s484 = ssub.s32 %s34, 1
        %s485 = sand.u32 %s47, 1
        %s486 = scalar_lea.sflag [#allocation3], %s485
        %s487 = sand.u32 %s47, 1
        %s488 = smul.addr %s487, 256
        %s489 = scalar_lea.vmem [#allocation2], %s488
        // Predicated region
        $region69: #{tpu_custom_call.1} parent=67 // pred_check
          %p490 = pneg %p60
        $region70: #{tpu_custom_call.1} parent=67 // pred_check_branch
          %492 = sbr.rel (%p490) target = $region72
        $region71: #{tpu_custom_call.1} parent=67 // pred_region
          %493 = dma.done %s486, 4096
        $region72: #{tpu_custom_call.1} parent=67 // pred_fallthru
          _
        %s494 = sand.u32 %s39, 1
        %s495 = scalar_lea.sflag [#allocation6], %s494
        %s496 = sand.u32 %s73, 1
        %s497 = smul.addr %s496, 256
        %s498 = scalar_lea.vmem [#allocation5], %s497
        // Predicated region
        $region73: #{tpu_custom_call.1} parent=67 // pred_check
          %p499 = pneg %p86
        $region74: #{tpu_custom_call.1} parent=67 // pred_check_branch
          %501 = sbr.rel (%p499) target = $region76
        $region75: #{tpu_custom_call.1} parent=67 // pred_region
          %502 = dma.done %s495, 4096
        $region76: #{tpu_custom_call.1} parent=67 // pred_fallthru
          _
        // Predicated region
        $region77: #{tpu_custom_call.1} parent=67 // pred_check
          %p503 = pneg %p107
        $region78: #{tpu_custom_call.1} parent=67 // pred_check_branch
          %505 = sbr.rel (%p503) target = $region80
        $region79: #{tpu_custom_call.1} parent=67 // pred_region
          %506 = dma.done [#allocation6], 2048
        $region80: #{tpu_custom_call.1} parent=67 // pred_fallthru
          _
        // Predicated region
        $region81: #{tpu_custom_call.1} parent=67 // pred_check
          %p507 = pneg %p191
        $region82: #{tpu_custom_call.1} parent=67 // pred_check_branch
          %509 = sbr.rel (%p507) target = $region84
        $region83: #{tpu_custom_call.1} parent=67 // pred_region
          %510 = dma.done [#allocation9], 512
        $region84: #{tpu_custom_call.1} parent=67 // pred_fallthru
          _
        // Predicated region
        $region85: #{tpu_custom_call.1} parent=67 // pred_check
          %p511 = pneg %p233
        $region86: #{tpu_custom_call.1} parent=67 // pred_check_branch
          %513 = sbr.rel (%p511) target = $region88
        $region87: #{tpu_custom_call.1} parent=67 // pred_region
          %514 = dma.done [#allocation9], 1024
        $region88: #{tpu_custom_call.1} parent=67 // pred_fallthru
          _
        // Predicated region
        $region89: #{tpu_custom_call.1} parent=67 // pred_check
          %p515 = pneg %p254
        $region90: #{tpu_custom_call.1} parent=67 // pred_check_branch
          %517 = sbr.rel (%p515) target = $region92
        $region91: #{tpu_custom_call.1} parent=67 // pred_region
          %518 = dma.done [#allocation12], 16
        $region92: #{tpu_custom_call.1} parent=67 // pred_fallthru
          _
        %s519 = sand.u32 %s47, 1
        %s520 = scalar_lea.sflag [#allocation3], %s519
        %s521 = sand.u32 %s47, 1
        %s522 = smul.addr %s521, 256
        %s523 = scalar_lea.vmem [#allocation2], %s522
        %p524 = pneg %p60
        %p525 = pneg %p57
        %s526 = sand.u32 %s39, 1
        %s527 = scalar_lea.sflag [#allocation6], %s526
        %s528 = sand.u32 %s73, 1
        %s529 = smul.addr %s528, 256
        %s530 = scalar_lea.vmem [#allocation5], %s529
        %p531 = pneg %p86
        %p532 = pneg %p83
        %p533 = pneg %p107
        %p534 = pneg %p104
        %p535 = pneg %p128
        %p536 = pneg %p125
        %p537 = pneg %p149
        %p538 = pneg %p146
        %p539 = pneg %p170
        %p540 = pneg %p167
        %p541 = pneg %p191
        %p542 = pneg %p188
        %p543 = pneg %p212
        %p544 = pneg %p209
        %p545 = pneg %p233
        %p546 = pneg %p230
        %p547 = pneg %p254
        %p548 = pneg %p251
        %p549 = pneg %p275
        %p550 = pneg %p272
        %p551 = pneg %p296
        %p552 = pneg %p293
        %p553 = pneg %p322
        %p554 = pneg %p319
        %s555 = sand.u32 %s309, 1
        %s556 = scalar_lea.sflag [#allocation4], %s555
        %s557 = sand.u32 %s309, 1
        %s558 = smul.addr %s557, 256
        %s559 = scalar_lea.vmem [#allocation13], %s558
        %p560 = pneg %p348
        %p561 = pneg %p345
        %s562 = sand.u32 %s335, 1
        %s563 = scalar_lea.sflag [#allocation15], %s562
        %s564 = sand.u32 %s335, 1
        %s565 = smul.addr %s564, 256
        %s566 = scalar_lea.vmem [#allocation14], %s565
        %s567 = smul.u32 32, %s39
        %s568 = smul.u32 32, %s39
        %s569 = smul.u32 32, %s39
        %s570 = smul.u32 32, %s39
        %v572 = vld [vmem:[%s489] sm:$0xff]
        %v573 = vld [vmem:[%s489 + $0x8] sm:$0xff]
        %v574 = vld [vmem:[%s489 + $0x10] sm:$0xff]
        %v575 = vld [vmem:[%s489 + $0x18] sm:$0xff]
        %v576 = vld [vmem:[%s489 + $0x20] sm:$0xff]
        %v577 = vld [vmem:[%s489 + $0x28] sm:$0xff]
        %v578 = vld [vmem:[%s489 + $0x30] sm:$0xff]
        %v579 = vld [vmem:[%s489 + $0x38] sm:$0xff]
        %v580 = vld [vmem:[%s489 + $0x40] sm:$0xff]
        %v581 = vld [vmem:[%s489 + $0x48] sm:$0xff]
        %v582 = vld [vmem:[%s489 + $0x50] sm:$0xff]
        %v583 = vld [vmem:[%s489 + $0x58] sm:$0xff]
        %v584 = vld [vmem:[%s489 + $0x60] sm:$0xff]
        %v585 = vld [vmem:[%s489 + $0x68] sm:$0xff]
        %v586 = vld [vmem:[%s489 + $0x70] sm:$0xff]
        %v587 = vld [vmem:[%s489 + $0x78] sm:$0xff]
        %v588 = vld [vmem:[%s489 + $0x80] sm:$0xff]
        %v589 = vld [vmem:[%s489 + $0x88] sm:$0xff]
        %v590 = vld [vmem:[%s489 + $0x90] sm:$0xff]
        %v591 = vld [vmem:[%s489 + $0x98] sm:$0xff]
        %v592 = vld [vmem:[%s489 + $0xa0] sm:$0xff]
        %v593 = vld [vmem:[%s489 + $0xa8] sm:$0xff]
        %v594 = vld [vmem:[%s489 + $0xb0] sm:$0xff]
        %v595 = vld [vmem:[%s489 + $0xb8] sm:$0xff]
        %v596 = vld [vmem:[%s489 + $0xc0] sm:$0xff]
        %v597 = vld [vmem:[%s489 + $0xc8] sm:$0xff]
        %v598 = vld [vmem:[%s489 + $0xd0] sm:$0xff]
        %v599 = vld [vmem:[%s489 + $0xd8] sm:$0xff]
        %v600 = vld [vmem:[%s489 + $0xe0] sm:$0xff]
        %v601 = vld [vmem:[%s489 + $0xe8] sm:$0xff]
        %v602 = vld [vmem:[%s489 + $0xf0] sm:$0xff]
        %v603 = vld [vmem:[%s489 + $0xf8] sm:$0xff]
        %v604 = vld [vmem:[#allocation7] sm:$0xf]
        %v605 = vld [vmem:[#allocation7 + $0x4] sm:$0xf]
        %v606 = vld [vmem:[#allocation7 + $0x8] sm:$0xf]
        %v607 = vld [vmem:[#allocation7 + $0xc] sm:$0xf]
        %v608 = vld [vmem:[#allocation7 + $0x10] sm:$0xf]
        %v609 = vld [vmem:[#allocation7 + $0x14] sm:$0xf]
        %v610 = vld [vmem:[#allocation7 + $0x18] sm:$0xf]
        %v611 = vld [vmem:[#allocation7 + $0x1c] sm:$0xf]
        %v612 = vld [vmem:[#allocation7 + $0x20] sm:$0xf]
        %v613 = vld [vmem:[#allocation7 + $0x24] sm:$0xf]
        %v614 = vld [vmem:[#allocation7 + $0x28] sm:$0xf]
        %v615 = vld [vmem:[#allocation7 + $0x2c] sm:$0xf]
        %v616 = vld [vmem:[#allocation7 + $0x30] sm:$0xf]
        %v617 = vld [vmem:[#allocation7 + $0x34] sm:$0xf]
        %v618 = vld [vmem:[#allocation7 + $0x38] sm:$0xf]
        %v619 = vld [vmem:[#allocation7 + $0x3c] sm:$0xf]
        %v620 = vld [vmem:[#allocation7 + $0x40] sm:$0xf]
        %v621 = vld [vmem:[#allocation7 + $0x44] sm:$0xf]
        %v622 = vld [vmem:[#allocation7 + $0x48] sm:$0xf]
        %v623 = vld [vmem:[#allocation7 + $0x4c] sm:$0xf]
        %v624 = vld [vmem:[#allocation7 + $0x50] sm:$0xf]
        %v625 = vld [vmem:[#allocation7 + $0x54] sm:$0xf]
        %v626 = vld [vmem:[#allocation7 + $0x58] sm:$0xf]
        %v627 = vld [vmem:[#allocation7 + $0x5c] sm:$0xf]
        %v628 = vld [vmem:[#allocation7 + $0x60] sm:$0xf]
        %v629 = vld [vmem:[#allocation7 + $0x64] sm:$0xf]
        %v630 = vld [vmem:[#allocation7 + $0x68] sm:$0xf]
        %v631 = vld [vmem:[#allocation7 + $0x6c] sm:$0xf]
        %v632 = vld [vmem:[#allocation7 + $0x70] sm:$0xf]
        %v633 = vld [vmem:[#allocation7 + $0x74] sm:$0xf]
        %v634 = vld [vmem:[#allocation7 + $0x78] sm:$0xf]
        %v635 = vld [vmem:[#allocation7 + $0x7c] sm:$0xf]
        %v636 = vld [vmem:[%s3] sm:$0x1]
        %v638 = vlaneseq
        %v639 = vshrl.u32 %v638, 7
        %v640 = vsub.s32 0, %v639
        %v641 = vrot.slane %v636, %v640
        %v675 = vunpack.c.l.b16 %v572
        %v676 = vunpack.c.h.b16 %v572
        %v677 = vunpack.c.l.b16 %v573
        %v678 = vunpack.c.h.b16 %v573
        %v679 = vunpack.c.l.b16 %v574
        %v680 = vunpack.c.h.b16 %v574
        %v681 = vunpack.c.l.b16 %v575
        %v682 = vunpack.c.h.b16 %v575
        %v683 = vunpack.c.l.b16 %v576
        %v684 = vunpack.c.h.b16 %v576
        %v685 = vunpack.c.l.b16 %v577
        %v686 = vunpack.c.h.b16 %v577
        %v687 = vunpack.c.l.b16 %v578
        %v688 = vunpack.c.h.b16 %v578
        %v689 = vunpack.c.l.b16 %v579
        %v690 = vunpack.c.h.b16 %v579
        %v691 = vunpack.c.l.b16 %v580
        %v692 = vunpack.c.h.b16 %v580
        %v693 = vunpack.c.l.b16 %v581
        %v694 = vunpack.c.h.b16 %v581
        %v695 = vunpack.c.l.b16 %v582
        %v696 = vunpack.c.h.b16 %v582
        %v697 = vunpack.c.l.b16 %v583
        %v698 = vunpack.c.h.b16 %v583
        %v699 = vunpack.c.l.b16 %v584
        %v700 = vunpack.c.h.b16 %v584
        %v701 = vunpack.c.l.b16 %v585
        %v702 = vunpack.c.h.b16 %v585
        %v703 = vunpack.c.l.b16 %v586
        %v704 = vunpack.c.h.b16 %v586
        %v705 = vunpack.c.l.b16 %v587
        %v706 = vunpack.c.h.b16 %v587
        %v707 = vunpack.c.l.b16 %v588
        %v708 = vunpack.c.h.b16 %v588
        %v709 = vunpack.c.l.b16 %v589
        %v710 = vunpack.c.h.b16 %v589
        %v711 = vunpack.c.l.b16 %v590
        %v712 = vunpack.c.h.b16 %v590
        %v713 = vunpack.c.l.b16 %v591
        %v714 = vunpack.c.h.b16 %v591
        %v715 = vunpack.c.l.b16 %v592
        %v716 = vunpack.c.h.b16 %v592
        %v717 = vunpack.c.l.b16 %v593
        %v718 = vunpack.c.h.b16 %v593
        %v719 = vunpack.c.l.b16 %v594
        %v720 = vunpack.c.h.b16 %v594
        %v721 = vunpack.c.l.b16 %v595
        %v722 = vunpack.c.h.b16 %v595
        %v723 = vunpack.c.l.b16 %v596
        %v724 = vunpack.c.h.b16 %v596
        %v725 = vunpack.c.l.b16 %v597
        %v726 = vunpack.c.h.b16 %v597
        %v727 = vunpack.c.l.b16 %v598
        %v728 = vunpack.c.h.b16 %v598
        %v729 = vunpack.c.l.b16 %v599
        %v730 = vunpack.c.h.b16 %v599
        %v731 = vunpack.c.l.b16 %v600
        %v732 = vunpack.c.h.b16 %v600
        %v733 = vunpack.c.l.b16 %v601
        %v734 = vunpack.c.h.b16 %v601
        %v735 = vunpack.c.l.b16 %v602
        %v736 = vunpack.c.h.b16 %v602
        %v737 = vunpack.c.l.b16 %v603
        %v738 = vunpack.c.h.b16 %v603
        %v739 = vpack.c.b16 %v677, %v675
        %v740 = vpack.c.b16 %v678, %v676
        %v741 = vpack.c.b16 %v681, %v679
        %v742 = vpack.c.b16 %v682, %v680
        %v743 = vpack.c.b16 %v685, %v683
        %v744 = vpack.c.b16 %v686, %v684
        %v745 = vpack.c.b16 %v689, %v687
        %v746 = vpack.c.b16 %v690, %v688
        %v747 = vpack.c.b16 %v693, %v691
        %v748 = vpack.c.b16 %v694, %v692
        %v749 = vpack.c.b16 %v697, %v695
        %v750 = vpack.c.b16 %v698, %v696
        %v751 = vpack.c.b16 %v701, %v699
        %v752 = vpack.c.b16 %v702, %v700
        %v753 = vpack.c.b16 %v705, %v703
        %v754 = vpack.c.b16 %v706, %v704
        %v755 = vpack.c.b16 %v709, %v707
        %v756 = vpack.c.b16 %v710, %v708
        %v757 = vpack.c.b16 %v713, %v711
        %v758 = vpack.c.b16 %v714, %v712
        %v759 = vpack.c.b16 %v717, %v715
        %v760 = vpack.c.b16 %v718, %v716
        %v761 = vpack.c.b16 %v721, %v719
        %v762 = vpack.c.b16 %v722, %v720
        %v763 = vpack.c.b16 %v725, %v723
        %v764 = vpack.c.b16 %v726, %v724
        %v765 = vpack.c.b16 %v729, %v727
        %v766 = vpack.c.b16 %v730, %v728
        %v767 = vpack.c.b16 %v733, %v731
        %v768 = vpack.c.b16 %v734, %v732
        %v769 = vpack.c.b16 %v737, %v735
        %v770 = vpack.c.b16 %v738, %v736
        %v835 = vunpack.c.l.b16 %v604
        %v836 = vunpack.c.l.b16 %v605
        %v837 = vunpack.c.l.b16 %v606
        %v838 = vunpack.c.l.b16 %v607
        %v839 = vunpack.c.l.b16 %v608
        %v840 = vunpack.c.l.b16 %v609
        %v841 = vunpack.c.l.b16 %v610
        %v842 = vunpack.c.l.b16 %v611
        %v843 = vunpack.c.l.b16 %v612
        %v844 = vunpack.c.l.b16 %v613
        %v845 = vunpack.c.l.b16 %v614
        %v846 = vunpack.c.l.b16 %v615
        %v847 = vunpack.c.l.b16 %v616
        %v848 = vunpack.c.l.b16 %v617
        %v849 = vunpack.c.l.b16 %v618
        %v850 = vunpack.c.l.b16 %v619
        %v851 = vunpack.c.l.b16 %v620
        %v852 = vunpack.c.l.b16 %v621
        %v853 = vunpack.c.l.b16 %v622
        %v854 = vunpack.c.l.b16 %v623
        %v855 = vunpack.c.l.b16 %v624
        %v856 = vunpack.c.l.b16 %v625
        %v857 = vunpack.c.l.b16 %v626
        %v858 = vunpack.c.l.b16 %v627
        %v859 = vunpack.c.l.b16 %v628
        %v860 = vunpack.c.l.b16 %v629
        %v861 = vunpack.c.l.b16 %v630
        %v862 = vunpack.c.l.b16 %v631
        %v863 = vunpack.c.l.b16 %v632
        %v864 = vunpack.c.l.b16 %v633
        %v865 = vunpack.c.l.b16 %v634
        %v866 = vunpack.c.l.b16 %v635
        %v867 = vpack.c.b16 %v836, %v835
        %v868 = vpack.c.b16 %v838, %v837
        %v869 = vpack.c.b16 %v840, %v839
        %v870 = vpack.c.b16 %v842, %v841
        %v871 = vpack.c.b16 %v844, %v843
        %v872 = vpack.c.b16 %v846, %v845
        %v873 = vpack.c.b16 %v848, %v847
        %v874 = vpack.c.b16 %v850, %v849
        %v875 = vpack.c.b16 %v852, %v851
        %v876 = vpack.c.b16 %v854, %v853
        %v877 = vpack.c.b16 %v856, %v855
        %v878 = vpack.c.b16 %v858, %v857
        %v879 = vpack.c.b16 %v860, %v859
        %v880 = vpack.c.b16 %v862, %v861
        %v881 = vpack.c.b16 %v864, %v863
        %v882 = vpack.c.b16 %v866, %v865
        %899 = vmatprep.subr.bf16.mxu0 0
        %900 = vmatpush1.bf16.msra.mxu0 %v867
        %901 = vmatprep.subr.bf16.mxu0 0
        %902 = vmatpush1.bf16.msra.mxu0 %v868
        %903 = vmatprep.subr.bf16.mxu0 0
        %904 = vmatpush1.bf16.msra.mxu0 %v869
        %905 = vmatprep.subr.bf16.mxu0 0
        %906 = vmatpush1.bf16.msra.mxu0 %v870
        %907 = vmatprep.subr.bf16.mxu0 0
        %908 = vmatpush1.bf16.msra.mxu0 %v871
        %909 = vmatprep.subr.bf16.mxu0 0
        %910 = vmatpush1.bf16.msra.mxu0 %v872
        %911 = vmatprep.subr.bf16.mxu0 0
        %912 = vmatpush1.bf16.msra.mxu0 %v873
        %913 = vmatprep.subr.bf16.mxu0 0
        %914 = vmatpush1.bf16.msra.mxu0 %v874
        %915 = vmatprep.subr.bf16.mxu0 0
        %916 = vmatpush1.bf16.msra.mxu0 %v875
        %917 = vmatprep.subr.bf16.mxu0 0
        %918 = vmatpush1.bf16.msra.mxu0 %v876
        %919 = vmatprep.subr.bf16.mxu0 0
        %920 = vmatpush1.bf16.msra.mxu0 %v877
        %921 = vmatprep.subr.bf16.mxu0 0
        %922 = vmatpush1.bf16.msra.mxu0 %v878
        %923 = vmatprep.subr.bf16.mxu0 0
        %924 = vmatpush1.bf16.msra.mxu0 %v879
        %925 = vmatprep.subr.bf16.mxu0 0
        %926 = vmatpush1.bf16.msra.mxu0 %v880
        %927 = vmatprep.subr.bf16.mxu0 0
        %928 = vmatpush1.bf16.msra.mxu0 %v881
        %929 = vmatprep.subr.bf16.mxu0 0
        %930 = vmatpush1.bf16.msra.mxu0 %v882
        %931 = vmatprep.mubr.bf16.mxu0 %v740
        %932 = vmatmul.mubr.bf16.gmra.mrb[0].mxu0 %v739
        %v933 = vpop.f32.mrb[0].mxu0
        %v934 = vadd.f32 %v641, %v933
        %v935 = vpop.f32.mrb[0].mxu0
        %v936 = vpop.f32.mrb[0].mxu0
        %v937 = vadd.f32 %v641, %v936
        %v938 = vpop.f32.mrb[0].mxu0
        %939 = vmatprep.mubr.bf16.mxu0 %v742
        %940 = vmatmul.mubr.bf16.gmra.mrb[0].mxu0 %v741
        %v941 = vpop.f32.mrb[0].mxu0
        %v942 = vadd.f32 %v641, %v941
        %v943 = vpop.f32.mrb[0].mxu0
        %v944 = vpop.f32.mrb[0].mxu0
        %v945 = vadd.f32 %v641, %v944
        %v946 = vpop.f32.mrb[0].mxu0
        %947 = vmatprep.mubr.bf16.mxu0 %v744
        %948 = vmatmul.mubr.bf16.gmra.mrb[0].mxu0 %v743
        %v949 = vpop.f32.mrb[0].mxu0
        %v950 = vadd.f32 %v641, %v949
        %v951 = vpop.f32.mrb[0].mxu0
        %v952 = vpop.f32.mrb[0].mxu0
        %v953 = vadd.f32 %v641, %v952
        %v954 = vpop.f32.mrb[0].mxu0
        %955 = vmatprep.mubr.bf16.mxu0 %v746
        %956 = vmatmul.mubr.bf16.gmra.mrb[0].mxu0 %v745
        %v957 = vpop.f32.mrb[0].mxu0
        %v958 = vadd.f32 %v641, %v957
        %v959 = vpop.f32.mrb[0].mxu0
        %v960 = vpop.f32.mrb[0].mxu0
        %v961 = vadd.f32 %v641, %v960
        %v962 = vpop.f32.mrb[0].mxu0
        %963 = vmatprep.mubr.bf16.mxu0 %v748
        %964 = vmatmul.mubr.bf16.gmra.mrb[0].mxu0 %v747
        %v965 = vpop.f32.mrb[0].mxu0
        %v966 = vadd.f32 %v641, %v965
        %v967 = vpop.f32.mrb[0].mxu0
        %v968 = vpop.f32.mrb[0].mxu0
        %v969 = vadd.f32 %v641, %v968
        %v970 = vpop.f32.mrb[0].mxu0
        %971 = vmatprep.mubr.bf16.mxu0 %v750
        %972 = vmatmul.mubr.bf16.gmra.mrb[0].mxu0 %v749
        %v973 = vpop.f32.mrb[0].mxu0
        %v974 = vadd.f32 %v641, %v973
        %v975 = vpop.f32.mrb[0].mxu0
        %v976 = vpop.f32.mrb[0].mxu0
        %v977 = vadd.f32 %v641, %v976
        %v978 = vpop.f32.mrb[0].mxu0
        %979 = vmatprep.mubr.bf16.mxu0 %v752
        %980 = vmatmul.mubr.bf16.gmra.mrb[0].mxu0 %v751
        %v981 = vpop.f32.mrb[0].mxu0
        %v982 = vadd.f32 %v641, %v981
        %v983 = vpop.f32.mrb[0].mxu0
        %v984 = vpop.f32.mrb[0].mxu0
        %v985 = vadd.f32 %v641, %v984
        %v986 = vpop.f32.mrb[0].mxu0
        %987 = vmatprep.mubr.bf16.mxu0 %v754
        %988 = vmatmul.mubr.bf16.gmra.mrb[0].mxu0 %v753
        %v989 = vpop.f32.mrb[0].mxu0
        %v990 = vadd.f32 %v641, %v989
        %v991 = vpop.f32.mrb[0].mxu0
        %v992 = vpop.f32.mrb[0].mxu0
        %v993 = vadd.f32 %v641, %v992
        %v994 = vpop.f32.mrb[0].mxu0
        %995 = vmatprep.mubr.bf16.mxu0 %v756
        %996 = vmatmul.mubr.bf16.gmra.mrb[0].mxu0 %v755
        %v997 = vpop.f32.mrb[0].mxu0
        %v998 = vadd.f32 %v641, %v997
        %v999 = vpop.f32.mrb[0].mxu0
        %v1000 = vpop.f32.mrb[0].mxu0
        %v1001 = vadd.f32 %v641, %v1000
        %v1002 = vpop.f32.mrb[0].mxu0
        %1003 = vmatprep.mubr.bf16.mxu0 %v758
        %1004 = vmatmul.mubr.bf16.gmra.mrb[0].mxu0 %v757
        %v1005 = vpop.f32.mrb[0].mxu0
        %v1006 = vadd.f32 %v641, %v1005
        %v1007 = vpop.f32.mrb[0].mxu0
        %v1008 = vpop.f32.mrb[0].mxu0
        %v1009 = vadd.f32 %v641, %v1008
        %v1010 = vpop.f32.mrb[0].mxu0
        %1011 = vmatprep.mubr.bf16.mxu0 %v760
        %1012 = vmatmul.mubr.bf16.gmra.mrb[0].mxu0 %v759
        %v1013 = vpop.f32.mrb[0].mxu0
        %v1014 = vadd.f32 %v641, %v1013
        %v1015 = vpop.f32.mrb[0].mxu0
        %v1016 = vpop.f32.mrb[0].mxu0
        %v1017 = vadd.f32 %v641, %v1016
        %v1018 = vpop.f32.mrb[0].mxu0
        %1019 = vmatprep.mubr.bf16.mxu0 %v762
        %1020 = vmatmul.mubr.bf16.gmra.mrb[0].mxu0 %v761
        %v1021 = vpop.f32.mrb[0].mxu0
        %v1022 = vadd.f32 %v641, %v1021
        %v1023 = vpop.f32.mrb[0].mxu0
        %v1024 = vpop.f32.mrb[0].mxu0
        %v1025 = vadd.f32 %v641, %v1024
        %v1026 = vpop.f32.mrb[0].mxu0
        %1027 = vmatprep.mubr.bf16.mxu0 %v764
        %1028 = vmatmul.mubr.bf16.gmra.mrb[0].mxu0 %v763
        %v1029 = vpop.f32.mrb[0].mxu0
        %v1030 = vadd.f32 %v641, %v1029
        %v1031 = vpop.f32.mrb[0].mxu0
        %v1032 = vpop.f32.mrb[0].mxu0
        %v1033 = vadd.f32 %v641, %v1032
        %v1034 = vpop.f32.mrb[0].mxu0
        %1035 = vmatprep.mubr.bf16.mxu0 %v766
        %1036 = vmatmul.mubr.bf16.gmra.mrb[0].mxu0 %v765
        %v1037 = vpop.f32.mrb[0].mxu0
        %v1038 = vadd.f32 %v641, %v1037
        %v1039 = vpop.f32.mrb[0].mxu0
        %v1040 = vpop.f32.mrb[0].mxu0
        %v1041 = vadd.f32 %v641, %v1040
        %v1042 = vpop.f32.mrb[0].mxu0
        %1043 = vmatprep.mubr.bf16.mxu0 %v768
        %1044 = vmatmul.mubr.bf16.gmra.mrb[0].mxu0 %v767
        %v1045 = vpop.f32.mrb[0].mxu0
        %v1046 = vadd.f32 %v641, %v1045
        %v1047 = vpop.f32.mrb[0].mxu0
        %v1048 = vpop.f32.mrb[0].mxu0
        %v1049 = vadd.f32 %v641, %v1048
        %v1050 = vpop.f32.mrb[0].mxu0
        %1051 = vmatprep.mubr.bf16.mxu0 %v770
        %1052 = vmatmul.mubr.bf16.gmra.mrb[0].mxu0 %v769
        %v1053 = vpop.f32.mrb[0].mxu0
        %v1054 = vadd.f32 %v641, %v1053
        %v1055 = vpop.f32.mrb[0].mxu0
        %v1056 = vpop.f32.mrb[0].mxu0
        %v1057 = vadd.f32 %v641, %v1056
        %v1058 = vpop.f32.mrb[0].mxu0
        %1059 = vdwg.mxu0
        %v1060 = vmul.f32 %v934, 0.2
        %v1061 = vmul.f32 %v937, 0.2
        %v1062 = vmul.f32 %v942, 0.2
        %v1063 = vmul.f32 %v945, 0.2
        %v1064 = vmul.f32 %v950, 0.2
        %v1065 = vmul.f32 %v953, 0.2
        %v1066 = vmul.f32 %v958, 0.2
        %v1067 = vmul.f32 %v961, 0.2
        %v1068 = vmul.f32 %v966, 0.2
        %v1069 = vmul.f32 %v969, 0.2
        %v1070 = vmul.f32 %v974, 0.2
        %v1071 = vmul.f32 %v977, 0.2
        %v1072 = vmul.f32 %v982, 0.2
        %v1073 = vmul.f32 %v985, 0.2
        %v1074 = vmul.f32 %v990, 0.2
        %v1075 = vmul.f32 %v993, 0.2
        %v1076 = vmul.f32 %v998, 0.2
        %v1077 = vmul.f32 %v1001, 0.2
        %v1078 = vmul.f32 %v1006, 0.2
        %v1079 = vmul.f32 %v1009, 0.2
        %v1080 = vmul.f32 %v1014, 0.2
        %v1081 = vmul.f32 %v1017, 0.2
        %v1082 = vmul.f32 %v1022, 0.2
        %v1083 = vmul.f32 %v1025, 0.2
        %v1084 = vmul.f32 %v1030, 0.2
        %v1085 = vmul.f32 %v1033, 0.2
        %v1086 = vmul.f32 %v1038, 0.2
        %v1087 = vmul.f32 %v1041, 0.2
        %v1088 = vmul.f32 %v1046, 0.2
        %v1089 = vmul.f32 %v1049, 0.2
        %v1090 = vmul.f32 %v1054, 0.2
        %v1091 = vmul.f32 %v1057, 0.2
        %v1092 = vmax.f32 %v934, %v1060
        %v1093 = vmax.f32 %v937, %v1061
        %v1094 = vmax.f32 %v942, %v1062
        %v1095 = vmax.f32 %v945, %v1063
        %v1096 = vmax.f32 %v950, %v1064
        %v1097 = vmax.f32 %v953, %v1065
        %v1098 = vmax.f32 %v958, %v1066
        %v1099 = vmax.f32 %v961, %v1067
        %v1100 = vmax.f32 %v966, %v1068
        %v1101 = vmax.f32 %v969, %v1069
        %v1102 = vmax.f32 %v974, %v1070
        %v1103 = vmax.f32 %v977, %v1071
        %v1104 = vmax.f32 %v982, %v1072
        %v1105 = vmax.f32 %v985, %v1073
        %v1106 = vmax.f32 %v990, %v1074
        %v1107 = vmax.f32 %v993, %v1075
        %v1108 = vmax.f32 %v998, %v1076
        %v1109 = vmax.f32 %v1001, %v1077
        %v1110 = vmax.f32 %v1006, %v1078
        %v1111 = vmax.f32 %v1009, %v1079
        %v1112 = vmax.f32 %v1014, %v1080
        %v1113 = vmax.f32 %v1017, %v1081
        %v1114 = vmax.f32 %v1022, %v1082
        %v1115 = vmax.f32 %v1025, %v1083
        %v1116 = vmax.f32 %v1030, %v1084
        %v1117 = vmax.f32 %v1033, %v1085
        %v1118 = vmax.f32 %v1038, %v1086
        %v1119 = vmax.f32 %v1041, %v1087
        %v1120 = vmax.f32 %v1046, %v1088
        %v1121 = vmax.f32 %v1049, %v1089
        %v1122 = vmax.f32 %v1054, %v1090
        %v1123 = vmax.f32 %v1057, %v1091
        %v1124 = vpack.c.bf16 %v1093, %v1092
        %v1125 = vpack.c.bf16 %v1095, %v1094
        %v1126 = vpack.c.bf16 %v1097, %v1096
        %v1127 = vpack.c.bf16 %v1099, %v1098
        %v1128 = vpack.c.bf16 %v1101, %v1100
        %v1129 = vpack.c.bf16 %v1103, %v1102
        %v1130 = vpack.c.bf16 %v1105, %v1104
        %v1131 = vpack.c.bf16 %v1107, %v1106
        %v1132 = vpack.c.bf16 %v1109, %v1108
        %v1133 = vpack.c.bf16 %v1111, %v1110
        %v1134 = vpack.c.bf16 %v1113, %v1112
        %v1135 = vpack.c.bf16 %v1115, %v1114
        %v1136 = vpack.c.bf16 %v1117, %v1116
        %v1137 = vpack.c.bf16 %v1119, %v1118
        %v1138 = vpack.c.bf16 %v1121, %v1120
        %v1139 = vpack.c.bf16 %v1123, %v1122
        %v1140 = vld [vmem:[%s4] sm:$0xf]
        %v1141 = vld [vmem:[%s4 + $0x4] sm:$0xf]
        %v1142 = vld [vmem:[%s4 + $0x8] sm:$0xf]
        %v1143 = vld [vmem:[%s4 + $0xc] sm:$0xf]
        %v1144 = vld [vmem:[%s4 + $0x10] sm:$0xf]
        %v1145 = vld [vmem:[%s4 + $0x14] sm:$0xf]
        %v1146 = vld [vmem:[%s4 + $0x18] sm:$0xf]
        %v1147 = vld [vmem:[%s4 + $0x1c] sm:$0xf]
        %v1148 = vld [vmem:[%s4 + $0x20] sm:$0xf]
        %v1149 = vld [vmem:[%s4 + $0x24] sm:$0xf]
        %v1150 = vld [vmem:[%s4 + $0x28] sm:$0xf]
        %v1151 = vld [vmem:[%s4 + $0x2c] sm:$0xf]
        %v1152 = vld [vmem:[%s4 + $0x30] sm:$0xf]
        %v1153 = vld [vmem:[%s4 + $0x34] sm:$0xf]
        %v1154 = vld [vmem:[%s4 + $0x38] sm:$0xf]
        %v1155 = vld [vmem:[%s4 + $0x3c] sm:$0xf]
        %v1156 = vld [vmem:[%s5] sm:$0x1]
        %v1158 = vlaneseq
        %v1159 = vshrl.u32 %v1158, 7
        %v1160 = vsub.s32 0, %v1159
        %v1161 = vrot.slane %v1156, %v1160
        %v1179 = vunpack.c.l.b16 %v1140
        %v1180 = vunpack.c.l.b16 %v1141
        %v1181 = vunpack.c.l.b16 %v1142
        %v1182 = vunpack.c.l.b16 %v1143
        %v1183 = vunpack.c.l.b16 %v1144
        %v1184 = vunpack.c.l.b16 %v1145
        %v1185 = vunpack.c.l.b16 %v1146
        %v1186 = vunpack.c.l.b16 %v1147
        %v1187 = vunpack.c.l.b16 %v1148
        %v1188 = vunpack.c.l.b16 %v1149
        %v1189 = vunpack.c.l.b16 %v1150
        %v1190 = vunpack.c.l.b16 %v1151
        %v1191 = vunpack.c.l.b16 %v1152
        %v1192 = vunpack.c.l.b16 %v1153
        %v1193 = vunpack.c.l.b16 %v1154
        %v1194 = vunpack.c.l.b16 %v1155
        %v1195 = vpack.c.b16 %v1180, %v1179
        %v1196 = vpack.c.b16 %v1182, %v1181
        %v1197 = vpack.c.b16 %v1184, %v1183
        %v1198 = vpack.c.b16 %v1186, %v1185
        %v1199 = vpack.c.b16 %v1188, %v1187
        %v1200 = vpack.c.b16 %v1190, %v1189
        %v1201 = vpack.c.b16 %v1192, %v1191
        %v1202 = vpack.c.b16 %v1194, %v1193
        %1211 = vmatprep.subr.bf16.mxu0 0
        %1212 = vmatpush1.bf16.msra.mxu0 %v1195
        %1213 = vmatprep.subr.bf16.mxu0 0
        %1214 = vmatpush1.bf16.msra.mxu0 %v1196
        %1215 = vmatprep.subr.bf16.mxu0 0
        %1216 = vmatpush1.bf16.msra.mxu0 %v1197
        %1217 = vmatprep.subr.bf16.mxu0 0
        %1218 = vmatpush1.bf16.msra.mxu0 %v1198
        %1219 = vmatprep.subr.bf16.mxu0 0
        %1220 = vmatpush1.bf16.msra.mxu0 %v1199
        %1221 = vmatprep.subr.bf16.mxu0 0
        %1222 = vmatpush1.bf16.msra.mxu0 %v1200
        %1223 = vmatprep.subr.bf16.mxu0 0
        %1224 = vmatpush1.bf16.msra.mxu0 %v1201
        %1225 = vmatprep.subr.bf16.mxu0 0
        %1226 = vmatpush1.bf16.msra.mxu0 %v1202
        %1227 = vmatprep.subr.bf16.mxu0 0
        %1228 = vmatpush1.bf16.msra.mxu0 0
        %1229 = vmatprep.subr.bf16.mxu0 0
        %1230 = vmatpush1.bf16.msra.mxu0 0
        %1231 = vmatprep.subr.bf16.mxu0 0
        %1232 = vmatpush1.bf16.msra.mxu0 0
        %1233 = vmatprep.subr.bf16.mxu0 0
        %1234 = vmatpush1.bf16.msra.mxu0 0
        %1235 = vmatprep.subr.bf16.mxu0 0
        %1236 = vmatpush1.bf16.msra.mxu0 0
        %1237 = vmatprep.subr.bf16.mxu0 0
        %1238 = vmatpush1.bf16.msra.mxu0 0
        %1239 = vmatprep.subr.bf16.mxu0 0
        %1240 = vmatpush1.bf16.msra.mxu0 0
        %1241 = vmatprep.subr.bf16.mxu0 0
        %1242 = vmatpush1.bf16.msra.mxu0 0
        %1243 = vmatprep.mubr.bf16.mxu0 0
        %1244 = vmatmul.mubr.bf16.gmra.mrb[0].mxu0 %v1124
        %v1245 = vpop.f32.mrb[0].mxu0
        %v1246 = vadd.f32 %v1161, %v1245
        %v1247 = vpop.f32.mrb[0].mxu0
        %v1248 = vpop.f32.mrb[0].mxu0
        %v1249 = vadd.f32 %v1161, %v1248
        %v1250 = vpop.f32.mrb[0].mxu0
        %1251 = vmatprep.mubr.bf16.mxu0 0
        %1252 = vmatmul.mubr.bf16.gmra.mrb[0].mxu0 %v1125
        %v1253 = vpop.f32.mrb[0].mxu0
        %v1254 = vadd.f32 %v1161, %v1253
        %v1255 = vpop.f32.mrb[0].mxu0
        %v1256 = vpop.f32.mrb[0].mxu0
        %v1257 = vadd.f32 %v1161, %v1256
        %v1258 = vpop.f32.mrb[0].mxu0
        %1259 = vmatprep.mubr.bf16.mxu0 0
        %1260 = vmatmul.mubr.bf16.gmra.mrb[0].mxu0 %v1126
        %v1261 = vpop.f32.mrb[0].mxu0
        %v1262 = vadd.f32 %v1161, %v1261
        %v1263 = vpop.f32.mrb[0].mxu0
        %v1264 = vpop.f32.mrb[0].mxu0
        %v1265 = vadd.f32 %v1161, %v1264
        %v1266 = vpop.f32.mrb[0].mxu0
        %1267 = vmatprep.mubr.bf16.mxu0 0
        %1268 = vmatmul.mubr.bf16.gmra.mrb[0].mxu0 %v1127
        %v1269 = vpop.f32.mrb[0].mxu0
        %v1270 = vadd.f32 %v1161, %v1269
        %v1271 = vpop.f32.mrb[0].mxu0
        %v1272 = vpop.f32.mrb[0].mxu0
        %v1273 = vadd.f32 %v1161, %v1272
        %v1274 = vpop.f32.mrb[0].mxu0
        %1275 = vmatprep.mubr.bf16.mxu0 0
        %1276 = vmatmul.mubr.bf16.gmra.mrb[0].mxu0 %v1128
        %v1277 = vpop.f32.mrb[0].mxu0
        %v1278 = vadd.f32 %v1161, %v1277
        %v1279 = vpop.f32.mrb[0].mxu0
        %v1280 = vpop.f32.mrb[0].mxu0
        %v1281 = vadd.f32 %v1161, %v1280
        %v1282 = vpop.f32.mrb[0].mxu0
        %1283 = vmatprep.mubr.bf16.mxu0 0
        %1284 = vmatmul.mubr.bf16.gmra.mrb[0].mxu0 %v1129
        %v1285 = vpop.f32.mrb[0].mxu0
        %v1286 = vadd.f32 %v1161, %v1285
        %v1287 = vpop.f32.mrb[0].mxu0
        %v1288 = vpop.f32.mrb[0].mxu0
        %v1289 = vadd.f32 %v1161, %v1288
        %v1290 = vpop.f32.mrb[0].mxu0
        %1291 = vmatprep.mubr.bf16.mxu0 0
        %1292 = vmatmul.mubr.bf16.gmra.mrb[0].mxu0 %v1130
        %v1293 = vpop.f32.mrb[0].mxu0
        %v1294 = vadd.f32 %v1161, %v1293
        %v1295 = vpop.f32.mrb[0].mxu0
        %v1296 = vpop.f32.mrb[0].mxu0
        %v1297 = vadd.f32 %v1161, %v1296
        %v1298 = vpop.f32.mrb[0].mxu0
        %1299 = vmatprep.mubr.bf16.mxu0 0
        %1300 = vmatmul.mubr.bf16.gmra.mrb[0].mxu0 %v1131
        %v1301 = vpop.f32.mrb[0].mxu0
        %v1302 = vadd.f32 %v1161, %v1301
        %v1303 = vpop.f32.mrb[0].mxu0
        %v1304 = vpop.f32.mrb[0].mxu0
        %v1305 = vadd.f32 %v1161, %v1304
        %v1306 = vpop.f32.mrb[0].mxu0
        %1307 = vmatprep.mubr.bf16.mxu0 0
        %1308 = vmatmul.mubr.bf16.gmra.mrb[0].mxu0 %v1132
        %v1309 = vpop.f32.mrb[0].mxu0
        %v1310 = vadd.f32 %v1161, %v1309
        %v1311 = vpop.f32.mrb[0].mxu0
        %v1312 = vpop.f32.mrb[0].mxu0
        %v1313 = vadd.f32 %v1161, %v1312
        %v1314 = vpop.f32.mrb[0].mxu0
        %1315 = vmatprep.mubr.bf16.mxu0 0
        %1316 = vmatmul.mubr.bf16.gmra.mrb[0].mxu0 %v1133
        %v1317 = vpop.f32.mrb[0].mxu0
        %v1318 = vadd.f32 %v1161, %v1317
        %v1319 = vpop.f32.mrb[0].mxu0
        %v1320 = vpop.f32.mrb[0].mxu0
        %v1321 = vadd.f32 %v1161, %v1320
        %v1322 = vpop.f32.mrb[0].mxu0
        %1323 = vmatprep.mubr.bf16.mxu0 0
        %1324 = vmatmul.mubr.bf16.gmra.mrb[0].mxu0 %v1134
        %v1325 = vpop.f32.mrb[0].mxu0
        %v1326 = vadd.f32 %v1161, %v1325
        %v1327 = vpop.f32.mrb[0].mxu0
        %v1328 = vpop.f32.mrb[0].mxu0
        %v1329 = vadd.f32 %v1161, %v1328
        %v1330 = vpop.f32.mrb[0].mxu0
        %1331 = vmatprep.mubr.bf16.mxu0 0
        %1332 = vmatmul.mubr.bf16.gmra.mrb[0].mxu0 %v1135
        %v1333 = vpop.f32.mrb[0].mxu0
        %v1334 = vadd.f32 %v1161, %v1333
        %v1335 = vpop.f32.mrb[0].mxu0
        %v1336 = vpop.f32.mrb[0].mxu0
        %v1337 = vadd.f32 %v1161, %v1336
        %v1338 = vpop.f32.mrb[0].mxu0
        %1339 = vmatprep.mubr.bf16.mxu0 0
        %1340 = vmatmul.mubr.bf16.gmra.mrb[0].mxu0 %v1136
        %v1341 = vpop.f32.mrb[0].mxu0
        %v1342 = vadd.f32 %v1161, %v1341
        %v1343 = vpop.f32.mrb[0].mxu0
        %v1344 = vpop.f32.mrb[0].mxu0
        %v1345 = vadd.f32 %v1161, %v1344
        %v1346 = vpop.f32.mrb[0].mxu0
        %1347 = vmatprep.mubr.bf16.mxu0 0
        %1348 = vmatmul.mubr.bf16.gmra.mrb[0].mxu0 %v1137
        %v1349 = vpop.f32.mrb[0].mxu0
        %v1350 = vadd.f32 %v1161, %v1349
        %v1351 = vpop.f32.mrb[0].mxu0
        %v1352 = vpop.f32.mrb[0].mxu0
        %v1353 = vadd.f32 %v1161, %v1352
        %v1354 = vpop.f32.mrb[0].mxu0
        %1355 = vmatprep.mubr.bf16.mxu0 0
        %1356 = vmatmul.mubr.bf16.gmra.mrb[0].mxu0 %v1138
        %v1357 = vpop.f32.mrb[0].mxu0
        %v1358 = vadd.f32 %v1161, %v1357
        %v1359 = vpop.f32.mrb[0].mxu0
        %v1360 = vpop.f32.mrb[0].mxu0
        %v1361 = vadd.f32 %v1161, %v1360
        %v1362 = vpop.f32.mrb[0].mxu0
        %1363 = vmatprep.mubr.bf16.mxu0 0
        %1364 = vmatmul.mubr.bf16.gmra.mrb[0].mxu0 %v1139
        %v1365 = vpop.f32.mrb[0].mxu0
        %v1366 = vadd.f32 %v1161, %v1365
        %v1367 = vpop.f32.mrb[0].mxu0
        %v1368 = vpop.f32.mrb[0].mxu0
        %v1369 = vadd.f32 %v1161, %v1368
        %v1370 = vpop.f32.mrb[0].mxu0
        %1371 = vdwg.mxu0
        %v1372 = vmul.f32 %v1246, 0.2
        %v1373 = vmul.f32 %v1249, 0.2
        %v1374 = vmul.f32 %v1254, 0.2
        %v1375 = vmul.f32 %v1257, 0.2
        %v1376 = vmul.f32 %v1262, 0.2
        %v1377 = vmul.f32 %v1265, 0.2
        %v1378 = vmul.f32 %v1270, 0.2
        %v1379 = vmul.f32 %v1273, 0.2
        %v1380 = vmul.f32 %v1278, 0.2
        %v1381 = vmul.f32 %v1281, 0.2
        %v1382 = vmul.f32 %v1286, 0.2
        %v1383 = vmul.f32 %v1289, 0.2
        %v1384 = vmul.f32 %v1294, 0.2
        %v1385 = vmul.f32 %v1297, 0.2
        %v1386 = vmul.f32 %v1302, 0.2
        %v1387 = vmul.f32 %v1305, 0.2
        %v1388 = vmul.f32 %v1310, 0.2
        %v1389 = vmul.f32 %v1313, 0.2
        %v1390 = vmul.f32 %v1318, 0.2
        %v1391 = vmul.f32 %v1321, 0.2
        %v1392 = vmul.f32 %v1326, 0.2
        %v1393 = vmul.f32 %v1329, 0.2
        %v1394 = vmul.f32 %v1334, 0.2
        %v1395 = vmul.f32 %v1337, 0.2
        %v1396 = vmul.f32 %v1342, 0.2
        %v1397 = vmul.f32 %v1345, 0.2
        %v1398 = vmul.f32 %v1350, 0.2
        %v1399 = vmul.f32 %v1353, 0.2
        %v1400 = vmul.f32 %v1358, 0.2
        %v1401 = vmul.f32 %v1361, 0.2
        %v1402 = vmul.f32 %v1366, 0.2
        %v1403 = vmul.f32 %v1369, 0.2
        %v1404 = vmax.f32 %v1246, %v1372
        %v1405 = vmax.f32 %v1249, %v1373
        %v1406 = vmax.f32 %v1254, %v1374
        %v1407 = vmax.f32 %v1257, %v1375
        %v1408 = vmax.f32 %v1262, %v1376
        %v1409 = vmax.f32 %v1265, %v1377
        %v1410 = vmax.f32 %v1270, %v1378
        %v1411 = vmax.f32 %v1273, %v1379
        %v1412 = vmax.f32 %v1278, %v1380
        %v1413 = vmax.f32 %v1281, %v1381
        %v1414 = vmax.f32 %v1286, %v1382
        %v1415 = vmax.f32 %v1289, %v1383
        %v1416 = vmax.f32 %v1294, %v1384
        %v1417 = vmax.f32 %v1297, %v1385
        %v1418 = vmax.f32 %v1302, %v1386
        %v1419 = vmax.f32 %v1305, %v1387
        %v1420 = vmax.f32 %v1310, %v1388
        %v1421 = vmax.f32 %v1313, %v1389
        %v1422 = vmax.f32 %v1318, %v1390
        %v1423 = vmax.f32 %v1321, %v1391
        %v1424 = vmax.f32 %v1326, %v1392
        %v1425 = vmax.f32 %v1329, %v1393
        %v1426 = vmax.f32 %v1334, %v1394
        %v1427 = vmax.f32 %v1337, %v1395
        %v1428 = vmax.f32 %v1342, %v1396
        %v1429 = vmax.f32 %v1345, %v1397
        %v1430 = vmax.f32 %v1350, %v1398
        %v1431 = vmax.f32 %v1353, %v1399
        %v1432 = vmax.f32 %v1358, %v1400
        %v1433 = vmax.f32 %v1361, %v1401
        %v1434 = vmax.f32 %v1366, %v1402
        %v1435 = vmax.f32 %v1369, %v1403
        %v1436 = vpack.c.bf16 %v1405, %v1404
        %v1437 = vpack.c.bf16 %v1407, %v1406
        %v1438 = vpack.c.bf16 %v1409, %v1408
        %v1439 = vpack.c.bf16 %v1411, %v1410
        %v1440 = vpack.c.bf16 %v1413, %v1412
        %v1441 = vpack.c.bf16 %v1415, %v1414
        %v1442 = vpack.c.bf16 %v1417, %v1416
        %v1443 = vpack.c.bf16 %v1419, %v1418
        %v1444 = vpack.c.bf16 %v1421, %v1420
        %v1445 = vpack.c.bf16 %v1423, %v1422
        %v1446 = vpack.c.bf16 %v1425, %v1424
        %v1447 = vpack.c.bf16 %v1427, %v1426
        %v1448 = vpack.c.bf16 %v1429, %v1428
        %v1449 = vpack.c.bf16 %v1431, %v1430
        %v1450 = vpack.c.bf16 %v1433, %v1432
        %v1451 = vpack.c.bf16 %v1435, %v1434
        %v1452 = vld [vmem:[#allocation8] sm:$0xf]
        %v1453 = vld [vmem:[#allocation8 + $0x4] sm:$0xf]
        %v1454 = vld [vmem:[#allocation8 + $0x8] sm:$0xf]
        %v1455 = vld [vmem:[#allocation8 + $0xc] sm:$0xf]
        %v1456 = vld [vmem:[#allocation8 + $0x10] sm:$0xf]
        %v1457 = vld [vmem:[#allocation8 + $0x14] sm:$0xf]
        %v1458 = vld [vmem:[#allocation8 + $0x18] sm:$0xf]
        %v1459 = vld [vmem:[#allocation8 + $0x1c] sm:$0xf]
        %v1460 = vld [vmem:[%s7] sm:$0x1]
        %v1462 = vlaneseq
        %v1463 = vshrl.u32 %v1462, 7
        %v1464 = vsub.s32 0, %v1463
        %v1465 = vrot.slane %v1460, %v1464
        %v1475 = vunpack.c.l.b16 %v1452
        %v1476 = vunpack.c.l.b16 %v1453
        %v1477 = vunpack.c.l.b16 %v1454
        %v1478 = vunpack.c.l.b16 %v1455
        %v1479 = vunpack.c.l.b16 %v1456
        %v1480 = vunpack.c.l.b16 %v1457
        %v1481 = vunpack.c.l.b16 %v1458
        %v1482 = vunpack.c.l.b16 %v1459
        %v1483 = vpack.c.b16 %v1476, %v1475
        %v1484 = vpack.c.b16 %v1478, %v1477
        %v1485 = vpack.c.b16 %v1480, %v1479
        %v1486 = vpack.c.b16 %v1482, %v1481
        %vm1491 = vcmask 523264
        %v1493 = vsel %vm1491, %v1436, 0
        %v1496 = vsel %vm1491, %v1437, 0
        %v1499 = vsel %vm1491, %v1438, 0
        %v1502 = vsel %vm1491, %v1439, 0
        %v1505 = vsel %vm1491, %v1440, 0
        %v1508 = vsel %vm1491, %v1441, 0
        %v1511 = vsel %vm1491, %v1442, 0
        %v1514 = vsel %vm1491, %v1443, 0
        %v1517 = vsel %vm1491, %v1444, 0
        %v1520 = vsel %vm1491, %v1445, 0
        %v1523 = vsel %vm1491, %v1446, 0
        %v1526 = vsel %vm1491, %v1447, 0
        %v1529 = vsel %vm1491, %v1448, 0
        %v1532 = vsel %vm1491, %v1449, 0
        %v1535 = vsel %vm1491, %v1450, 0
        %v1538 = vsel %vm1491, %v1451, 0
        %1540 = vmatprep.subr.bf16.mxu0 0
        %1541 = vmatpush1.bf16.msra.mxu0 %v1483
        %1542 = vmatprep.subr.bf16.mxu0 0
        %1543 = vmatpush1.bf16.msra.mxu0 %v1484
        %1544 = vmatprep.subr.bf16.mxu0 0
        %1545 = vmatpush1.bf16.msra.mxu0 %v1485
        %1546 = vmatprep.subr.bf16.mxu0 0
        %1547 = vmatpush1.bf16.msra.mxu0 %v1486
        %1548 = vmatprep.subr.bf16.mxu0 0
        %1549 = vmatpush1.bf16.msra.mxu0 0
        %1550 = vmatprep.subr.bf16.mxu0 0
        %1551 = vmatpush1.bf16.msra.mxu0 0
        %1552 = vmatprep.subr.bf16.mxu0 0
        %1553 = vmatpush1.bf16.msra.mxu0 0
        %1554 = vmatprep.subr.bf16.mxu0 0
        %1555 = vmatpush1.bf16.msra.mxu0 0
        %1556 = vmatprep.subr.bf16.mxu0 0
        %1557 = vmatpush1.bf16.msra.mxu0 0
        %1558 = vmatprep.subr.bf16.mxu0 0
        %1559 = vmatpush1.bf16.msra.mxu0 0
        %1560 = vmatprep.subr.bf16.mxu0 0
        %1561 = vmatpush1.bf16.msra.mxu0 0
        %1562 = vmatprep.subr.bf16.mxu0 0
        %1563 = vmatpush1.bf16.msra.mxu0 0
        %1564 = vmatprep.subr.bf16.mxu0 0
        %1565 = vmatpush1.bf16.msra.mxu0 0
        %1566 = vmatprep.subr.bf16.mxu0 0
        %1567 = vmatpush1.bf16.msra.mxu0 0
        %1568 = vmatprep.subr.bf16.mxu0 0
        %1569 = vmatpush1.bf16.msra.mxu0 0
        %1570 = vmatprep.subr.bf16.mxu0 0
        %1571 = vmatpush1.bf16.msra.mxu0 0
        %1572 = vmatprep.mubr.bf16.mxu0 0
        %1573 = vmatmul.mubr.bf16.gmra.mrb[0].mxu0 %v1493
        %v1574 = vpop.f32.mrb[0].mxu0
        %v1575 = vadd.f32 %v1465, %v1574
        %v1576 = vpop.f32.mrb[0].mxu0
        %v1577 = vpop.f32.mrb[0].mxu0
        %v1578 = vadd.f32 %v1465, %v1577
        %v1579 = vpop.f32.mrb[0].mxu0
        %1580 = vmatprep.mubr.bf16.mxu0 0
        %1581 = vmatmul.mubr.bf16.gmra.mrb[0].mxu0 %v1496
        %v1582 = vpop.f32.mrb[0].mxu0
        %v1583 = vadd.f32 %v1465, %v1582
        %v1584 = vpop.f32.mrb[0].mxu0
        %v1585 = vpop.f32.mrb[0].mxu0
        %v1586 = vadd.f32 %v1465, %v1585
        %v1587 = vpop.f32.mrb[0].mxu0
        %1588 = vmatprep.mubr.bf16.mxu0 0
        %1589 = vmatmul.mubr.bf16.gmra.mrb[0].mxu0 %v1499
        %v1590 = vpop.f32.mrb[0].mxu0
        %v1591 = vadd.f32 %v1465, %v1590
        %v1592 = vpop.f32.mrb[0].mxu0
        %v1593 = vpop.f32.mrb[0].mxu0
        %v1594 = vadd.f32 %v1465, %v1593
        %v1595 = vpop.f32.mrb[0].mxu0
        %1596 = vmatprep.mubr.bf16.mxu0 0
        %1597 = vmatmul.mubr.bf16.gmra.mrb[0].mxu0 %v1502
        %v1598 = vpop.f32.mrb[0].mxu0
        %v1599 = vadd.f32 %v1465, %v1598
        %v1600 = vpop.f32.mrb[0].mxu0
        %v1601 = vpop.f32.mrb[0].mxu0
        %v1602 = vadd.f32 %v1465, %v1601
        %v1603 = vpop.f32.mrb[0].mxu0
        %1604 = vmatprep.mubr.bf16.mxu0 0
        %1605 = vmatmul.mubr.bf16.gmra.mrb[0].mxu0 %v1505
        %v1606 = vpop.f32.mrb[0].mxu0
        %v1607 = vadd.f32 %v1465, %v1606
        %v1608 = vpop.f32.mrb[0].mxu0
        %v1609 = vpop.f32.mrb[0].mxu0
        %v1610 = vadd.f32 %v1465, %v1609
        %v1611 = vpop.f32.mrb[0].mxu0
        %1612 = vmatprep.mubr.bf16.mxu0 0
        %1613 = vmatmul.mubr.bf16.gmra.mrb[0].mxu0 %v1508
        %v1614 = vpop.f32.mrb[0].mxu0
        %v1615 = vadd.f32 %v1465, %v1614
        %v1616 = vpop.f32.mrb[0].mxu0
        %v1617 = vpop.f32.mrb[0].mxu0
        %v1618 = vadd.f32 %v1465, %v1617
        %v1619 = vpop.f32.mrb[0].mxu0
        %1620 = vmatprep.mubr.bf16.mxu0 0
        %1621 = vmatmul.mubr.bf16.gmra.mrb[0].mxu0 %v1511
        %v1622 = vpop.f32.mrb[0].mxu0
        %v1623 = vadd.f32 %v1465, %v1622
        %v1624 = vpop.f32.mrb[0].mxu0
        %v1625 = vpop.f32.mrb[0].mxu0
        %v1626 = vadd.f32 %v1465, %v1625
        %v1627 = vpop.f32.mrb[0].mxu0
        %1628 = vmatprep.mubr.bf16.mxu0 0
        %1629 = vmatmul.mubr.bf16.gmra.mrb[0].mxu0 %v1514
        %v1630 = vpop.f32.mrb[0].mxu0
        %v1631 = vadd.f32 %v1465, %v1630
        %v1632 = vpop.f32.mrb[0].mxu0
        %v1633 = vpop.f32.mrb[0].mxu0
        %v1634 = vadd.f32 %v1465, %v1633
        %v1635 = vpop.f32.mrb[0].mxu0
        %1636 = vmatprep.mubr.bf16.mxu0 0
        %1637 = vmatmul.mubr.bf16.gmra.mrb[0].mxu0 %v1517
        %v1638 = vpop.f32.mrb[0].mxu0
        %v1639 = vadd.f32 %v1465, %v1638
        %v1640 = vpop.f32.mrb[0].mxu0
        %v1641 = vpop.f32.mrb[0].mxu0
        %v1642 = vadd.f32 %v1465, %v1641
        %v1643 = vpop.f32.mrb[0].mxu0
        %1644 = vmatprep.mubr.bf16.mxu0 0
        %1645 = vmatmul.mubr.bf16.gmra.mrb[0].mxu0 %v1520
        %v1646 = vpop.f32.mrb[0].mxu0
        %v1647 = vadd.f32 %v1465, %v1646
        %v1648 = vpop.f32.mrb[0].mxu0
        %v1649 = vpop.f32.mrb[0].mxu0
        %v1650 = vadd.f32 %v1465, %v1649
        %v1651 = vpop.f32.mrb[0].mxu0
        %1652 = vmatprep.mubr.bf16.mxu0 0
        %1653 = vmatmul.mubr.bf16.gmra.mrb[0].mxu0 %v1523
        %v1654 = vpop.f32.mrb[0].mxu0
        %v1655 = vadd.f32 %v1465, %v1654
        %v1656 = vpop.f32.mrb[0].mxu0
        %v1657 = vpop.f32.mrb[0].mxu0
        %v1658 = vadd.f32 %v1465, %v1657
        %v1659 = vpop.f32.mrb[0].mxu0
        %1660 = vmatprep.mubr.bf16.mxu0 0
        %1661 = vmatmul.mubr.bf16.gmra.mrb[0].mxu0 %v1526
        %v1662 = vpop.f32.mrb[0].mxu0
        %v1663 = vadd.f32 %v1465, %v1662
        %v1664 = vpop.f32.mrb[0].mxu0
        %v1665 = vpop.f32.mrb[0].mxu0
        %v1666 = vadd.f32 %v1465, %v1665
        %v1667 = vpop.f32.mrb[0].mxu0
        %1668 = vmatprep.mubr.bf16.mxu0 0
        %1669 = vmatmul.mubr.bf16.gmra.mrb[0].mxu0 %v1529
        %v1670 = vpop.f32.mrb[0].mxu0
        %v1671 = vadd.f32 %v1465, %v1670
        %v1672 = vpop.f32.mrb[0].mxu0
        %v1673 = vpop.f32.mrb[0].mxu0
        %v1674 = vadd.f32 %v1465, %v1673
        %v1675 = vpop.f32.mrb[0].mxu0
        %1676 = vmatprep.mubr.bf16.mxu0 0
        %1677 = vmatmul.mubr.bf16.gmra.mrb[0].mxu0 %v1532
        %v1678 = vpop.f32.mrb[0].mxu0
        %v1679 = vadd.f32 %v1465, %v1678
        %v1680 = vpop.f32.mrb[0].mxu0
        %v1681 = vpop.f32.mrb[0].mxu0
        %v1682 = vadd.f32 %v1465, %v1681
        %v1683 = vpop.f32.mrb[0].mxu0
        %1684 = vmatprep.mubr.bf16.mxu0 0
        %1685 = vmatmul.mubr.bf16.gmra.mrb[0].mxu0 %v1535
        %v1686 = vpop.f32.mrb[0].mxu0
        %v1687 = vadd.f32 %v1465, %v1686
        %v1688 = vpop.f32.mrb[0].mxu0
        %v1689 = vpop.f32.mrb[0].mxu0
        %v1690 = vadd.f32 %v1465, %v1689
        %v1691 = vpop.f32.mrb[0].mxu0
        %1692 = vmatprep.mubr.bf16.mxu0 0
        %1693 = vmatmul.mubr.bf16.gmra.mrb[0].mxu0 %v1538
        %v1694 = vpop.f32.mrb[0].mxu0
        %v1695 = vadd.f32 %v1465, %v1694
        %v1696 = vpop.f32.mrb[0].mxu0
        %v1697 = vpop.f32.mrb[0].mxu0
        %v1698 = vadd.f32 %v1465, %v1697
        %v1699 = vpop.f32.mrb[0].mxu0
        %1700 = vdwg.mxu0
        %v1701 = vmul.f32 %v1575, 0.5
        %v1702 = vmul.f32 %v1578, 0.5
        %v1703 = vmul.f32 %v1583, 0.5
        %v1704 = vmul.f32 %v1586, 0.5
        %v1705 = vmul.f32 %v1591, 0.5
        %v1706 = vmul.f32 %v1594, 0.5
        %v1707 = vmul.f32 %v1599, 0.5
        %v1708 = vmul.f32 %v1602, 0.5
        %v1709 = vmul.f32 %v1607, 0.5
        %v1710 = vmul.f32 %v1610, 0.5
        %v1711 = vmul.f32 %v1615, 0.5
        %v1712 = vmul.f32 %v1618, 0.5
        %v1713 = vmul.f32 %v1623, 0.5
        %v1714 = vmul.f32 %v1626, 0.5
        %v1715 = vmul.f32 %v1631, 0.5
        %v1716 = vmul.f32 %v1634, 0.5
        %v1717 = vmul.f32 %v1639, 0.5
        %v1718 = vmul.f32 %v1642, 0.5
        %v1719 = vmul.f32 %v1647, 0.5
        %v1720 = vmul.f32 %v1650, 0.5
        %v1721 = vmul.f32 %v1655, 0.5
        %v1722 = vmul.f32 %v1658, 0.5
        %v1723 = vmul.f32 %v1663, 0.5
        %v1724 = vmul.f32 %v1666, 0.5
        %v1725 = vmul.f32 %v1671, 0.5
        %v1726 = vmul.f32 %v1674, 0.5
        %v1727 = vmul.f32 %v1679, 0.5
        %v1728 = vmul.f32 %v1682, 0.5
        %v1729 = vmul.f32 %v1687, 0.5
        %v1730 = vmul.f32 %v1690, 0.5
        %v1731 = vmul.f32 %v1695, 0.5
        %v1732 = vmul.f32 %v1698, 0.5
        %v1733 = vmul.f32 %v1701, 1.442695
        %v1734 = vpow.pop %v1733
        %v1735 = vmul.f32 %v1702, 1.442695
        %v1736 = vpow.pop %v1735
        %v1737 = vmul.f32 %v1703, 1.442695
        %v1738 = vpow.pop %v1737
        %v1739 = vmul.f32 %v1704, 1.442695
        %v1740 = vpow.pop %v1739
        %v1741 = vmul.f32 %v1705, 1.442695
        %v1742 = vpow.pop %v1741
        %v1743 = vmul.f32 %v1706, 1.442695
        %v1744 = vpow.pop %v1743
        %v1745 = vmul.f32 %v1707, 1.442695
        %v1746 = vpow.pop %v1745
        %v1747 = vmul.f32 %v1708, 1.442695
        %v1748 = vpow.pop %v1747
        %v1749 = vmul.f32 %v1709, 1.442695
        %v1750 = vpow.pop %v1749
        %v1751 = vmul.f32 %v1710, 1.442695
        %v1752 = vpow.pop %v1751
        %v1753 = vmul.f32 %v1711, 1.442695
        %v1754 = vpow.pop %v1753
        %v1755 = vmul.f32 %v1712, 1.442695
        %v1756 = vpow.pop %v1755
        %v1757 = vmul.f32 %v1713, 1.442695
        %v1758 = vpow.pop %v1757
        %v1759 = vmul.f32 %v1714, 1.442695
        %v1760 = vpow.pop %v1759
        %v1761 = vmul.f32 %v1715, 1.442695
        %v1762 = vpow.pop %v1761
        %v1763 = vmul.f32 %v1716, 1.442695
        %v1764 = vpow.pop %v1763
        %v1765 = vmul.f32 %v1717, 1.442695
        %v1766 = vpow.pop %v1765
        %v1767 = vmul.f32 %v1718, 1.442695
        %v1768 = vpow.pop %v1767
        %v1769 = vmul.f32 %v1719, 1.442695
        %v1770 = vpow.pop %v1769
        %v1771 = vmul.f32 %v1720, 1.442695
        %v1772 = vpow.pop %v1771
        %v1773 = vmul.f32 %v1721, 1.442695
        %v1774 = vpow.pop %v1773
        %v1775 = vmul.f32 %v1722, 1.442695
        %v1776 = vpow.pop %v1775
        %v1777 = vmul.f32 %v1723, 1.442695
        %v1778 = vpow.pop %v1777
        %v1779 = vmul.f32 %v1724, 1.442695
        %v1780 = vpow.pop %v1779
        %v1781 = vmul.f32 %v1725, 1.442695
        %v1782 = vpow.pop %v1781
        %v1783 = vmul.f32 %v1726, 1.442695
        %v1784 = vpow.pop %v1783
        %v1785 = vmul.f32 %v1727, 1.442695
        %v1786 = vpow.pop %v1785
        %v1787 = vmul.f32 %v1728, 1.442695
        %v1788 = vpow.pop %v1787
        %v1789 = vmul.f32 %v1729, 1.442695
        %v1790 = vpow.pop %v1789
        %v1791 = vmul.f32 %v1730, 1.442695
        %v1792 = vpow.pop %v1791
        %v1793 = vmul.f32 %v1731, 1.442695
        %v1794 = vpow.pop %v1793
        %v1795 = vmul.f32 %v1732, 1.442695
        %v1796 = vpow.pop %v1795
        %1797 = vrot.lane.b32.xlu0 %v1734, 64
        %v1798 = vpop.permute.xlu0 %1797
        %1799 = vrot.lane.b32.xlu0 %v1736, 64
        %v1800 = vpop.permute.xlu0 %1799
        %1801 = vrot.lane.b32.xlu0 %v1738, 64
        %v1802 = vpop.permute.xlu0 %1801
        %1803 = vrot.lane.b32.xlu0 %v1740, 64
        %v1804 = vpop.permute.xlu0 %1803
        %1805 = vrot.lane.b32.xlu0 %v1742, 64
        %v1806 = vpop.permute.xlu0 %1805
        %1807 = vrot.lane.b32.xlu0 %v1744, 64
        %v1808 = vpop.permute.xlu0 %1807
        %1809 = vrot.lane.b32.xlu0 %v1746, 64
        %v1810 = vpop.permute.xlu0 %1809
        %1811 = vrot.lane.b32.xlu0 %v1748, 64
        %v1812 = vpop.permute.xlu0 %1811
        %1813 = vrot.lane.b32.xlu0 %v1750, 64
        %v1814 = vpop.permute.xlu0 %1813
        %1815 = vrot.lane.b32.xlu0 %v1752, 64
        %v1816 = vpop.permute.xlu0 %1815
        %1817 = vrot.lane.b32.xlu0 %v1754, 64
        %v1818 = vpop.permute.xlu0 %1817
        %1819 = vrot.lane.b32.xlu0 %v1756, 64
        %v1820 = vpop.permute.xlu0 %1819
        %1821 = vrot.lane.b32.xlu0 %v1758, 64
        %v1822 = vpop.permute.xlu0 %1821
        %1823 = vrot.lane.b32.xlu0 %v1760, 64
        %v1824 = vpop.permute.xlu0 %1823
        %1825 = vrot.lane.b32.xlu0 %v1762, 64
        %v1826 = vpop.permute.xlu0 %1825
        %1827 = vrot.lane.b32.xlu0 %v1764, 64
        %v1828 = vpop.permute.xlu0 %1827
        %1829 = vrot.lane.b32.xlu0 %v1766, 64
        %v1830 = vpop.permute.xlu0 %1829
        %1831 = vrot.lane.b32.xlu0 %v1768, 64
        %v1832 = vpop.permute.xlu0 %1831
        %1833 = vrot.lane.b32.xlu0 %v1770, 64
        %v1834 = vpop.permute.xlu0 %1833
        %1835 = vrot.lane.b32.xlu0 %v1772, 64
        %v1836 = vpop.permute.xlu0 %1835
        %1837 = vrot.lane.b32.xlu0 %v1774, 64
        %v1838 = vpop.permute.xlu0 %1837
        %1839 = vrot.lane.b32.xlu0 %v1776, 64
        %v1840 = vpop.permute.xlu0 %1839
        %1841 = vrot.lane.b32.xlu0 %v1778, 64
        %v1842 = vpop.permute.xlu0 %1841
        %1843 = vrot.lane.b32.xlu0 %v1780, 64
        %v1844 = vpop.permute.xlu0 %1843
        %1845 = vrot.lane.b32.xlu0 %v1782, 64
        %v1846 = vpop.permute.xlu0 %1845
        %1847 = vrot.lane.b32.xlu0 %v1784, 64
        %v1848 = vpop.permute.xlu0 %1847
        %1849 = vrot.lane.b32.xlu0 %v1786, 64
        %v1850 = vpop.permute.xlu0 %1849
        %1851 = vrot.lane.b32.xlu0 %v1788, 64
        %v1852 = vpop.permute.xlu0 %1851
        %1853 = vrot.lane.b32.xlu0 %v1790, 64
        %v1854 = vpop.permute.xlu0 %1853
        %1855 = vrot.lane.b32.xlu0 %v1792, 64
        %v1856 = vpop.permute.xlu0 %1855
        %1857 = vrot.lane.b32.xlu0 %v1794, 64
        %v1858 = vpop.permute.xlu0 %1857
        %1859 = vrot.lane.b32.xlu0 %v1796, 64
        %v1860 = vpop.permute.xlu0 %1859
        %v1861 = vld [vmem:[%s498] sm:$0xff]
        %v1862 = vld [vmem:[%s498 + $0x8] sm:$0xff]
        %v1863 = vld [vmem:[%s498 + $0x10] sm:$0xff]
        %v1864 = vld [vmem:[%s498 + $0x18] sm:$0xff]
        %v1865 = vld [vmem:[%s498 + $0x20] sm:$0xff]
        %v1866 = vld [vmem:[%s498 + $0x28] sm:$0xff]
        %v1867 = vld [vmem:[%s498 + $0x30] sm:$0xff]
        %v1868 = vld [vmem:[%s498 + $0x38] sm:$0xff]
        %v1869 = vld [vmem:[%s498 + $0x40] sm:$0xff]
        %v1870 = vld [vmem:[%s498 + $0x48] sm:$0xff]
        %v1871 = vld [vmem:[%s498 + $0x50] sm:$0xff]
        %v1872 = vld [vmem:[%s498 + $0x58] sm:$0xff]
        %v1873 = vld [vmem:[%s498 + $0x60] sm:$0xff]
        %v1874 = vld [vmem:[%s498 + $0x68] sm:$0xff]
        %v1875 = vld [vmem:[%s498 + $0x70] sm:$0xff]
        %v1876 = vld [vmem:[%s498 + $0x78] sm:$0xff]
        %v1877 = vld [vmem:[%s498 + $0x80] sm:$0xff]
        %v1878 = vld [vmem:[%s498 + $0x88] sm:$0xff]
        %v1879 = vld [vmem:[%s498 + $0x90] sm:$0xff]
        %v1880 = vld [vmem:[%s498 + $0x98] sm:$0xff]
        %v1881 = vld [vmem:[%s498 + $0xa0] sm:$0xff]
        %v1882 = vld [vmem:[%s498 + $0xa8] sm:$0xff]
        %v1883 = vld [vmem:[%s498 + $0xb0] sm:$0xff]
        %v1884 = vld [vmem:[%s498 + $0xb8] sm:$0xff]
        %v1885 = vld [vmem:[%s498 + $0xc0] sm:$0xff]
        %v1886 = vld [vmem:[%s498 + $0xc8] sm:$0xff]
        %v1887 = vld [vmem:[%s498 + $0xd0] sm:$0xff]
        %v1888 = vld [vmem:[%s498 + $0xd8] sm:$0xff]
        %v1889 = vld [vmem:[%s498 + $0xe0] sm:$0xff]
        %v1890 = vld [vmem:[%s498 + $0xe8] sm:$0xff]
        %v1891 = vld [vmem:[%s498 + $0xf0] sm:$0xff]
        %v1892 = vld [vmem:[%s498 + $0xf8] sm:$0xff]
        %v1893 = vmul.f32 %v1798, %v1861
        %v1894 = vmul.f32 %v1800, %v1862
        %v1895 = vmul.f32 %v1802, %v1863
        %v1896 = vmul.f32 %v1804, %v1864
        %v1897 = vmul.f32 %v1806, %v1865
        %v1898 = vmul.f32 %v1808, %v1866
        %v1899 = vmul.f32 %v1810, %v1867
        %v1900 = vmul.f32 %v1812, %v1868
        %v1901 = vmul.f32 %v1814, %v1869
        %v1902 = vmul.f32 %v1816, %v1870
        %v1903 = vmul.f32 %v1818, %v1871
        %v1904 = vmul.f32 %v1820, %v1872
        %v1905 = vmul.f32 %v1822, %v1873
        %v1906 = vmul.f32 %v1824, %v1874
        %v1907 = vmul.f32 %v1826, %v1875
        %v1908 = vmul.f32 %v1828, %v1876
        %v1909 = vmul.f32 %v1830, %v1877
        %v1910 = vmul.f32 %v1832, %v1878
        %v1911 = vmul.f32 %v1834, %v1879
        %v1912 = vmul.f32 %v1836, %v1880
        %v1913 = vmul.f32 %v1838, %v1881
        %v1914 = vmul.f32 %v1840, %v1882
        %v1915 = vmul.f32 %v1842, %v1883
        %v1916 = vmul.f32 %v1844, %v1884
        %v1917 = vmul.f32 %v1846, %v1885
        %v1918 = vmul.f32 %v1848, %v1886
        %v1919 = vmul.f32 %v1850, %v1887
        %v1920 = vmul.f32 %v1852, %v1888
        %v1921 = vmul.f32 %v1854, %v1889
        %v1922 = vmul.f32 %v1856, %v1890
        %v1923 = vmul.f32 %v1858, %v1891
        %v1924 = vmul.f32 %v1860, %v1892
        %v1925 = vadd.f32 %v1575, %v1893
        %v1926 = vadd.f32 %v1578, %v1894
        %v1927 = vadd.f32 %v1583, %v1895
        %v1928 = vadd.f32 %v1586, %v1896
        %v1929 = vadd.f32 %v1591, %v1897
        %v1930 = vadd.f32 %v1594, %v1898
        %v1931 = vadd.f32 %v1599, %v1899
        %v1932 = vadd.f32 %v1602, %v1900
        %v1933 = vadd.f32 %v1607, %v1901
        %v1934 = vadd.f32 %v1610, %v1902
        %v1935 = vadd.f32 %v1615, %v1903
        %v1936 = vadd.f32 %v1618, %v1904
        %v1937 = vadd.f32 %v1623, %v1905
        %v1938 = vadd.f32 %v1626, %v1906
        %v1939 = vadd.f32 %v1631, %v1907
        %v1940 = vadd.f32 %v1634, %v1908
        %v1941 = vadd.f32 %v1639, %v1909
        %v1942 = vadd.f32 %v1642, %v1910
        %v1943 = vadd.f32 %v1647, %v1911
        %v1944 = vadd.f32 %v1650, %v1912
        %v1945 = vadd.f32 %v1655, %v1913
        %v1946 = vadd.f32 %v1658, %v1914
        %v1947 = vadd.f32 %v1663, %v1915
        %v1948 = vadd.f32 %v1666, %v1916
        %v1949 = vadd.f32 %v1671, %v1917
        %v1950 = vadd.f32 %v1674, %v1918
        %v1951 = vadd.f32 %v1679, %v1919
        %v1952 = vadd.f32 %v1682, %v1920
        %v1953 = vadd.f32 %v1687, %v1921
        %v1954 = vadd.f32 %v1690, %v1922
        %v1955 = vadd.f32 %v1695, %v1923
        %v1956 = vadd.f32 %v1698, %v1924
        %v1957 = vpack.c.bf16 %v1926, %v1925
        %v1958 = vpack.c.bf16 %v1928, %v1927
        %v1959 = vpack.c.bf16 %v1930, %v1929
        %v1960 = vpack.c.bf16 %v1932, %v1931
        %v1961 = vpack.c.bf16 %v1934, %v1933
        %v1962 = vpack.c.bf16 %v1936, %v1935
        %v1963 = vpack.c.bf16 %v1938, %v1937
        %v1964 = vpack.c.bf16 %v1940, %v1939
        %v1965 = vpack.c.bf16 %v1942, %v1941
        %v1966 = vpack.c.bf16 %v1944, %v1943
        %v1967 = vpack.c.bf16 %v1946, %v1945
        %v1968 = vpack.c.bf16 %v1948, %v1947
        %v1969 = vpack.c.bf16 %v1950, %v1949
        %v1970 = vpack.c.bf16 %v1952, %v1951
        %v1971 = vpack.c.bf16 %v1954, %v1953
        %v1972 = vpack.c.bf16 %v1956, %v1955
        %v1973 = vld [vmem:[#allocation10] sm:$0xf]
        %v1974 = vld [vmem:[#allocation10 + $0x4] sm:$0xf]
        %v1975 = vld [vmem:[#allocation10 + $0x8] sm:$0xf]
        %v1976 = vld [vmem:[#allocation10 + $0xc] sm:$0xf]
        %v1977 = vld [vmem:[#allocation10 + $0x10] sm:$0xf]
        %v1978 = vld [vmem:[#allocation10 + $0x14] sm:$0xf]
        %v1979 = vld [vmem:[#allocation10 + $0x18] sm:$0xf]
        %v1980 = vld [vmem:[#allocation10 + $0x1c] sm:$0xf]
        %v1981 = vld [vmem:[#allocation10 + $0x20] sm:$0xf]
        %v1982 = vld [vmem:[#allocation10 + $0x24] sm:$0xf]
        %v1983 = vld [vmem:[#allocation10 + $0x28] sm:$0xf]
        %v1984 = vld [vmem:[#allocation10 + $0x2c] sm:$0xf]
        %v1985 = vld [vmem:[#allocation10 + $0x30] sm:$0xf]
        %v1986 = vld [vmem:[#allocation10 + $0x34] sm:$0xf]
        %v1987 = vld [vmem:[#allocation10 + $0x38] sm:$0xf]
        %v1988 = vld [vmem:[#allocation10 + $0x3c] sm:$0xf]
        %v1989 = vld [vmem:[#allocation11] sm:$0x1]
        %v1991 = vlaneseq
        %v1992 = vshrl.u32 %v1991, 7
        %v1993 = vsub.s32 0, %v1992
        %v1994 = vrot.slane %v1989, %v1993
        %v2012 = vunpack.c.l.b16 %v1973
        %v2013 = vunpack.c.l.b16 %v1974
        %v2014 = vunpack.c.l.b16 %v1975
        %v2015 = vunpack.c.l.b16 %v1976
        %v2016 = vunpack.c.l.b16 %v1977
        %v2017 = vunpack.c.l.b16 %v1978
        %v2018 = vunpack.c.l.b16 %v1979
        %v2019 = vunpack.c.l.b16 %v1980
        %v2020 = vunpack.c.l.b16 %v1981
        %v2021 = vunpack.c.l.b16 %v1982
        %v2022 = vunpack.c.l.b16 %v1983
        %v2023 = vunpack.c.l.b16 %v1984
        %v2024 = vunpack.c.l.b16 %v1985
        %v2025 = vunpack.c.l.b16 %v1986
        %v2026 = vunpack.c.l.b16 %v1987
        %v2027 = vunpack.c.l.b16 %v1988
        %v2028 = vpack.c.b16 %v2013, %v2012
        %v2029 = vpack.c.b16 %v2015, %v2014
        %v2030 = vpack.c.b16 %v2017, %v2016
        %v2031 = vpack.c.b16 %v2019, %v2018
        %v2032 = vpack.c.b16 %v2021, %v2020
        %v2033 = vpack.c.b16 %v2023, %v2022
        %v2034 = vpack.c.b16 %v2025, %v2024
        %v2035 = vpack.c.b16 %v2027, %v2026
        %2044 = vmatprep.subr.bf16.mxu0 0
        %2045 = vmatpush1.bf16.msra.mxu0 %v2028
        %2046 = vmatprep.subr.bf16.mxu0 0
        %2047 = vmatpush1.bf16.msra.mxu0 %v2029
        %2048 = vmatprep.subr.bf16.mxu0 0
        %2049 = vmatpush1.bf16.msra.mxu0 %v2030
        %2050 = vmatprep.subr.bf16.mxu0 0
        %2051 = vmatpush1.bf16.msra.mxu0 %v2031
        %2052 = vmatprep.subr.bf16.mxu0 0
        %2053 = vmatpush1.bf16.msra.mxu0 %v2032
        %2054 = vmatprep.subr.bf16.mxu0 0
        %2055 = vmatpush1.bf16.msra.mxu0 %v2033
        %2056 = vmatprep.subr.bf16.mxu0 0
        %2057 = vmatpush1.bf16.msra.mxu0 %v2034
        %2058 = vmatprep.subr.bf16.mxu0 0
        %2059 = vmatpush1.bf16.msra.mxu0 %v2035
        %2060 = vmatprep.subr.bf16.mxu0 0
        %2061 = vmatpush1.bf16.msra.mxu0 0
        %2062 = vmatprep.subr.bf16.mxu0 0
        %2063 = vmatpush1.bf16.msra.mxu0 0
        %2064 = vmatprep.subr.bf16.mxu0 0
        %2065 = vmatpush1.bf16.msra.mxu0 0
        %2066 = vmatprep.subr.bf16.mxu0 0
        %2067 = vmatpush1.bf16.msra.mxu0 0
        %2068 = vmatprep.subr.bf16.mxu0 0
        %2069 = vmatpush1.bf16.msra.mxu0 0
        %2070 = vmatprep.subr.bf16.mxu0 0
        %2071 = vmatpush1.bf16.msra.mxu0 0
        %2072 = vmatprep.subr.bf16.mxu0 0
        %2073 = vmatpush1.bf16.msra.mxu0 0
        %2074 = vmatprep.subr.bf16.mxu0 0
        %2075 = vmatpush1.bf16.msra.mxu0 0
        %2076 = vmatprep.mubr.bf16.mxu0 0
        %2077 = vmatmul.mubr.bf16.gmra.mrb[0].mxu0 %v1957
        %v2078 = vpop.f32.mrb[0].mxu0
        %v2079 = vadd.f32 %v1994, %v2078
        %v2080 = vpop.f32.mrb[0].mxu0
        %v2081 = vpop.f32.mrb[0].mxu0
        %v2082 = vadd.f32 %v1994, %v2081
        %v2083 = vpop.f32.mrb[0].mxu0
        %2084 = vmatprep.mubr.bf16.mxu0 0
        %2085 = vmatmul.mubr.bf16.gmra.mrb[0].mxu0 %v1958
        %v2086 = vpop.f32.mrb[0].mxu0
        %v2087 = vadd.f32 %v1994, %v2086
        %v2088 = vpop.f32.mrb[0].mxu0
        %v2089 = vpop.f32.mrb[0].mxu0
        %v2090 = vadd.f32 %v1994, %v2089
        %v2091 = vpop.f32.mrb[0].mxu0
        %2092 = vmatprep.mubr.bf16.mxu0 0
        %2093 = vmatmul.mubr.bf16.gmra.mrb[0].mxu0 %v1959
        %v2094 = vpop.f32.mrb[0].mxu0
        %v2095 = vadd.f32 %v1994, %v2094
        %v2096 = vpop.f32.mrb[0].mxu0
        %v2097 = vpop.f32.mrb[0].mxu0
        %v2098 = vadd.f32 %v1994, %v2097
        %v2099 = vpop.f32.mrb[0].mxu0
        %2100 = vmatprep.mubr.bf16.mxu0 0
        %2101 = vmatmul.mubr.bf16.gmra.mrb[0].mxu0 %v1960
        %v2102 = vpop.f32.mrb[0].mxu0
        %v2103 = vadd.f32 %v1994, %v2102
        %v2104 = vpop.f32.mrb[0].mxu0
        %v2105 = vpop.f32.mrb[0].mxu0
        %v2106 = vadd.f32 %v1994, %v2105
        %v2107 = vpop.f32.mrb[0].mxu0
        %2108 = vmatprep.mubr.bf16.mxu0 0
        %2109 = vmatmul.mubr.bf16.gmra.mrb[0].mxu0 %v1961
        %v2110 = vpop.f32.mrb[0].mxu0
        %v2111 = vadd.f32 %v1994, %v2110
        %v2112 = vpop.f32.mrb[0].mxu0
        %v2113 = vpop.f32.mrb[0].mxu0
        %v2114 = vadd.f32 %v1994, %v2113
        %v2115 = vpop.f32.mrb[0].mxu0
        %2116 = vmatprep.mubr.bf16.mxu0 0
        %2117 = vmatmul.mubr.bf16.gmra.mrb[0].mxu0 %v1962
        %v2118 = vpop.f32.mrb[0].mxu0
        %v2119 = vadd.f32 %v1994, %v2118
        %v2120 = vpop.f32.mrb[0].mxu0
        %v2121 = vpop.f32.mrb[0].mxu0
        %v2122 = vadd.f32 %v1994, %v2121
        %v2123 = vpop.f32.mrb[0].mxu0
        %2124 = vmatprep.mubr.bf16.mxu0 0
        %2125 = vmatmul.mubr.bf16.gmra.mrb[0].mxu0 %v1963
        %v2126 = vpop.f32.mrb[0].mxu0
        %v2127 = vadd.f32 %v1994, %v2126
        %v2128 = vpop.f32.mrb[0].mxu0
        %v2129 = vpop.f32.mrb[0].mxu0
        %v2130 = vadd.f32 %v1994, %v2129
        %v2131 = vpop.f32.mrb[0].mxu0
        %2132 = vmatprep.mubr.bf16.mxu0 0
        %2133 = vmatmul.mubr.bf16.gmra.mrb[0].mxu0 %v1964
        %v2134 = vpop.f32.mrb[0].mxu0
        %v2135 = vadd.f32 %v1994, %v2134
        %v2136 = vpop.f32.mrb[0].mxu0
        %v2137 = vpop.f32.mrb[0].mxu0
        %v2138 = vadd.f32 %v1994, %v2137
        %v2139 = vpop.f32.mrb[0].mxu0
        %2140 = vmatprep.mubr.bf16.mxu0 0
        %2141 = vmatmul.mubr.bf16.gmra.mrb[0].mxu0 %v1965
        %v2142 = vpop.f32.mrb[0].mxu0
        %v2143 = vadd.f32 %v1994, %v2142
        %v2144 = vpop.f32.mrb[0].mxu0
        %v2145 = vpop.f32.mrb[0].mxu0
        %v2146 = vadd.f32 %v1994, %v2145
        %v2147 = vpop.f32.mrb[0].mxu0
        %2148 = vmatprep.mubr.bf16.mxu0 0
        %2149 = vmatmul.mubr.bf16.gmra.mrb[0].mxu0 %v1966
        %v2150 = vpop.f32.mrb[0].mxu0
        %v2151 = vadd.f32 %v1994, %v2150
        %v2152 = vpop.f32.mrb[0].mxu0
        %v2153 = vpop.f32.mrb[0].mxu0
        %v2154 = vadd.f32 %v1994, %v2153
        %v2155 = vpop.f32.mrb[0].mxu0
        %2156 = vmatprep.mubr.bf16.mxu0 0
        %2157 = vmatmul.mubr.bf16.gmra.mrb[0].mxu0 %v1967
        %v2158 = vpop.f32.mrb[0].mxu0
        %v2159 = vadd.f32 %v1994, %v2158
        %v2160 = vpop.f32.mrb[0].mxu0
        %v2161 = vpop.f32.mrb[0].mxu0
        %v2162 = vadd.f32 %v1994, %v2161
        %v2163 = vpop.f32.mrb[0].mxu0
        %2164 = vmatprep.mubr.bf16.mxu0 0
        %2165 = vmatmul.mubr.bf16.gmra.mrb[0].mxu0 %v1968
        %v2166 = vpop.f32.mrb[0].mxu0
        %v2167 = vadd.f32 %v1994, %v2166
        %v2168 = vpop.f32.mrb[0].mxu0
        %v2169 = vpop.f32.mrb[0].mxu0
        %v2170 = vadd.f32 %v1994, %v2169
        %v2171 = vpop.f32.mrb[0].mxu0
        %2172 = vmatprep.mubr.bf16.mxu0 0
        %2173 = vmatmul.mubr.bf16.gmra.mrb[0].mxu0 %v1969
        %v2174 = vpop.f32.mrb[0].mxu0
        %v2175 = vadd.f32 %v1994, %v2174
        %v2176 = vpop.f32.mrb[0].mxu0
        %v2177 = vpop.f32.mrb[0].mxu0
        %v2178 = vadd.f32 %v1994, %v2177
        %v2179 = vpop.f32.mrb[0].mxu0
        %2180 = vmatprep.mubr.bf16.mxu0 0
        %2181 = vmatmul.mubr.bf16.gmra.mrb[0].mxu0 %v1970
        %v2182 = vpop.f32.mrb[0].mxu0
        %v2183 = vadd.f32 %v1994, %v2182
        %v2184 = vpop.f32.mrb[0].mxu0
        %v2185 = vpop.f32.mrb[0].mxu0
        %v2186 = vadd.f32 %v1994, %v2185
        %v2187 = vpop.f32.mrb[0].mxu0
        %2188 = vmatprep.mubr.bf16.mxu0 0
        %2189 = vmatmul.mubr.bf16.gmra.mrb[0].mxu0 %v1971
        %v2190 = vpop.f32.mrb[0].mxu0
        %v2191 = vadd.f32 %v1994, %v2190
        %v2192 = vpop.f32.mrb[0].mxu0
        %v2193 = vpop.f32.mrb[0].mxu0
        %v2194 = vadd.f32 %v1994, %v2193
        %v2195 = vpop.f32.mrb[0].mxu0
        %2196 = vmatprep.mubr.bf16.mxu0 0
        %2197 = vmatmul.mubr.bf16.gmra.mrb[0].mxu0 %v1972
        %v2198 = vpop.f32.mrb[0].mxu0
        %v2199 = vadd.f32 %v1994, %v2198
        %v2200 = vpop.f32.mrb[0].mxu0
        %v2201 = vpop.f32.mrb[0].mxu0
        %v2202 = vadd.f32 %v1994, %v2201
        %v2203 = vpop.f32.mrb[0].mxu0
        %2204 = vdwg.mxu0
        %v2205 = vmul.f32 %v2079, 0.2
        %v2206 = vmul.f32 %v2082, 0.2
        %v2207 = vmul.f32 %v2087, 0.2
        %v2208 = vmul.f32 %v2090, 0.2
        %v2209 = vmul.f32 %v2095, 0.2
        %v2210 = vmul.f32 %v2098, 0.2
        %v2211 = vmul.f32 %v2103, 0.2
        %v2212 = vmul.f32 %v2106, 0.2
        %v2213 = vmul.f32 %v2111, 0.2
        %v2214 = vmul.f32 %v2114, 0.2
        %v2215 = vmul.f32 %v2119, 0.2
        %v2216 = vmul.f32 %v2122, 0.2
        %v2217 = vmul.f32 %v2127, 0.2
        %v2218 = vmul.f32 %v2130, 0.2
        %v2219 = vmul.f32 %v2135, 0.2
        %v2220 = vmul.f32 %v2138, 0.2
        %v2221 = vmul.f32 %v2143, 0.2
        %v2222 = vmul.f32 %v2146, 0.2
        %v2223 = vmul.f32 %v2151, 0.2
        %v2224 = vmul.f32 %v2154, 0.2
        %v2225 = vmul.f32 %v2159, 0.2
        %v2226 = vmul.f32 %v2162, 0.2
        %v2227 = vmul.f32 %v2167, 0.2
        %v2228 = vmul.f32 %v2170, 0.2
        %v2229 = vmul.f32 %v2175, 0.2
        %v2230 = vmul.f32 %v2178, 0.2
        %v2231 = vmul.f32 %v2183, 0.2
        %v2232 = vmul.f32 %v2186, 0.2
        %v2233 = vmul.f32 %v2191, 0.2
        %v2234 = vmul.f32 %v2194, 0.2
        %v2235 = vmul.f32 %v2199, 0.2
        %v2236 = vmul.f32 %v2202, 0.2
        %v2237 = vmax.f32 %v2079, %v2205
        %v2238 = vmax.f32 %v2082, %v2206
        %v2239 = vmax.f32 %v2087, %v2207
        %v2240 = vmax.f32 %v2090, %v2208
        %v2241 = vmax.f32 %v2095, %v2209
        %v2242 = vmax.f32 %v2098, %v2210
        %v2243 = vmax.f32 %v2103, %v2211
        %v2244 = vmax.f32 %v2106, %v2212
        %v2245 = vmax.f32 %v2111, %v2213
        %v2246 = vmax.f32 %v2114, %v2214
        %v2247 = vmax.f32 %v2119, %v2215
        %v2248 = vmax.f32 %v2122, %v2216
        %v2249 = vmax.f32 %v2127, %v2217
        %v2250 = vmax.f32 %v2130, %v2218
        %v2251 = vmax.f32 %v2135, %v2219
        %v2252 = vmax.f32 %v2138, %v2220
        %v2253 = vmax.f32 %v2143, %v2221
        %v2254 = vmax.f32 %v2146, %v2222
        %v2255 = vmax.f32 %v2151, %v2223
        %v2256 = vmax.f32 %v2154, %v2224
        %v2257 = vmax.f32 %v2159, %v2225
        %v2258 = vmax.f32 %v2162, %v2226
        %v2259 = vmax.f32 %v2167, %v2227
        %v2260 = vmax.f32 %v2170, %v2228
        %v2261 = vmax.f32 %v2175, %v2229
        %v2262 = vmax.f32 %v2178, %v2230
        %v2263 = vmax.f32 %v2183, %v2231
        %v2264 = vmax.f32 %v2186, %v2232
        %v2265 = vmax.f32 %v2191, %v2233
        %v2266 = vmax.f32 %v2194, %v2234
        %v2267 = vmax.f32 %v2199, %v2235
        %v2268 = vmax.f32 %v2202, %v2236
        %v2269 = vpack.c.bf16 %v2238, %v2237
        %v2270 = vpack.c.bf16 %v2240, %v2239
        %v2271 = vpack.c.bf16 %v2242, %v2241
        %v2272 = vpack.c.bf16 %v2244, %v2243
        %v2273 = vpack.c.bf16 %v2246, %v2245
        %v2274 = vpack.c.bf16 %v2248, %v2247
        %v2275 = vpack.c.bf16 %v2250, %v2249
        %v2276 = vpack.c.bf16 %v2252, %v2251
        %v2277 = vpack.c.bf16 %v2254, %v2253
        %v2278 = vpack.c.bf16 %v2256, %v2255
        %v2279 = vpack.c.bf16 %v2258, %v2257
        %v2280 = vpack.c.bf16 %v2260, %v2259
        %v2281 = vpack.c.bf16 %v2262, %v2261
        %v2282 = vpack.c.bf16 %v2264, %v2263
        %v2283 = vpack.c.bf16 %v2266, %v2265
        %v2284 = vpack.c.bf16 %v2268, %v2267
        %v2285 = vld [vmem:[%s10] sm:$0xff]
        %v2286 = vld [vmem:[%s10 + $0x8] sm:$0xff]
        %v2287 = vld [vmem:[%s10 + $0x10] sm:$0xff]
        %v2288 = vld [vmem:[%s10 + $0x18] sm:$0xff]
        %v2289 = vld [vmem:[%s10 + $0x20] sm:$0xff]
        %v2290 = vld [vmem:[%s10 + $0x28] sm:$0xff]
        %v2291 = vld [vmem:[%s10 + $0x30] sm:$0xff]
        %v2292 = vld [vmem:[%s10 + $0x38] sm:$0xff]
        %v2293 = vld [vmem:[%s10 + $0x40] sm:$0xff]
        %v2294 = vld [vmem:[%s10 + $0x48] sm:$0xff]
        %v2295 = vld [vmem:[%s10 + $0x50] sm:$0xff]
        %v2296 = vld [vmem:[%s10 + $0x58] sm:$0xff]
        %v2297 = vld [vmem:[%s10 + $0x60] sm:$0xff]
        %v2298 = vld [vmem:[%s10 + $0x68] sm:$0xff]
        %v2299 = vld [vmem:[%s10 + $0x70] sm:$0xff]
        %v2300 = vld [vmem:[%s10 + $0x78] sm:$0xff]
        %v2301 = vld [vmem:[%s11] sm:$0x3]
        %v2303 = vlaneseq
        %v2304 = vshrl.u32 %v2303, 7
        %v2305 = vsub.s32 0, %v2304
        %v2306 = vrot.slane %v2301, %v2305
        %v2307 = vlaneseq
        %v2308 = vshrl.u32 %v2307, 7
        %v2309 = vsub.s32 1, %v2308
        %v2310 = vrot.slane %v2301, %v2309
        %v2329 = vunpack.c.l.b16 %v2285
        %v2330 = vunpack.c.h.b16 %v2285
        %v2331 = vunpack.c.l.b16 %v2286
        %v2332 = vunpack.c.h.b16 %v2286
        %v2333 = vunpack.c.l.b16 %v2287
        %v2334 = vunpack.c.h.b16 %v2287
        %v2335 = vunpack.c.l.b16 %v2288
        %v2336 = vunpack.c.h.b16 %v2288
        %v2337 = vunpack.c.l.b16 %v2289
        %v2338 = vunpack.c.h.b16 %v2289
        %v2339 = vunpack.c.l.b16 %v2290
        %v2340 = vunpack.c.h.b16 %v2290
        %v2341 = vunpack.c.l.b16 %v2291
        %v2342 = vunpack.c.h.b16 %v2291
        %v2343 = vunpack.c.l.b16 %v2292
        %v2344 = vunpack.c.h.b16 %v2292
        %v2345 = vunpack.c.l.b16 %v2293
        %v2346 = vunpack.c.h.b16 %v2293
        %v2347 = vunpack.c.l.b16 %v2294
        %v2348 = vunpack.c.h.b16 %v2294
        %v2349 = vunpack.c.l.b16 %v2295
        %v2350 = vunpack.c.h.b16 %v2295
        %v2351 = vunpack.c.l.b16 %v2296
        %v2352 = vunpack.c.h.b16 %v2296
        %v2353 = vunpack.c.l.b16 %v2297
        %v2354 = vunpack.c.h.b16 %v2297
        %v2355 = vunpack.c.l.b16 %v2298
        %v2356 = vunpack.c.h.b16 %v2298
        %v2357 = vunpack.c.l.b16 %v2299
        %v2358 = vunpack.c.h.b16 %v2299
        %v2359 = vunpack.c.l.b16 %v2300
        %v2360 = vunpack.c.h.b16 %v2300
        %v2361 = vpack.c.b16 %v2331, %v2329
        %v2362 = vpack.c.b16 %v2332, %v2330
        %v2363 = vpack.c.b16 %v2335, %v2333
        %v2364 = vpack.c.b16 %v2336, %v2334
        %v2365 = vpack.c.b16 %v2339, %v2337
        %v2366 = vpack.c.b16 %v2340, %v2338
        %v2367 = vpack.c.b16 %v2343, %v2341
        %v2368 = vpack.c.b16 %v2344, %v2342
        %v2369 = vpack.c.b16 %v2347, %v2345
        %v2370 = vpack.c.b16 %v2348, %v2346
        %v2371 = vpack.c.b16 %v2351, %v2349
        %v2372 = vpack.c.b16 %v2352, %v2350
        %v2373 = vpack.c.b16 %v2355, %v2353
        %v2374 = vpack.c.b16 %v2356, %v2354
        %v2375 = vpack.c.b16 %v2359, %v2357
        %v2376 = vpack.c.b16 %v2360, %v2358
        %2393 = vmatprep.subr.bf16.mxu0 %v2362
        %2394 = vmatpush1.bf16.msra.mxu0 %v2361
        %2395 = vmatprep.subr.bf16.mxu0 %v2364
        %2396 = vmatpush1.bf16.msra.mxu0 %v2363
        %2397 = vmatprep.subr.bf16.mxu0 %v2366
        %2398 = vmatpush1.bf16.msra.mxu0 %v2365
        %2399 = vmatprep.subr.bf16.mxu0 %v2368
        %2400 = vmatpush1.bf16.msra.mxu0 %v2367
        %2401 = vmatprep.subr.bf16.mxu0 %v2370
        %2402 = vmatpush1.bf16.msra.mxu0 %v2369
        %2403 = vmatprep.subr.bf16.mxu0 %v2372
        %2404 = vmatpush1.bf16.msra.mxu0 %v2371
        %2405 = vmatprep.subr.bf16.mxu0 %v2374
        %2406 = vmatpush1.bf16.msra.mxu0 %v2373
        %2407 = vmatprep.subr.bf16.mxu0 %v2376
        %2408 = vmatpush1.bf16.msra.mxu0 %v2375
        %2409 = vmatprep.subr.bf16.mxu0 0
        %2410 = vmatpush1.bf16.msra.mxu0 0
        %2411 = vmatprep.subr.bf16.mxu0 0
        %2412 = vmatpush1.bf16.msra.mxu0 0
        %2413 = vmatprep.subr.bf16.mxu0 0
        %2414 = vmatpush1.bf16.msra.mxu0 0
        %2415 = vmatprep.subr.bf16.mxu0 0
        %2416 = vmatpush1.bf16.msra.mxu0 0
        %2417 = vmatprep.subr.bf16.mxu0 0
        %2418 = vmatpush1.bf16.msra.mxu0 0
        %2419 = vmatprep.subr.bf16.mxu0 0
        %2420 = vmatpush1.bf16.msra.mxu0 0
        %2421 = vmatprep.subr.bf16.mxu0 0
        %2422 = vmatpush1.bf16.msra.mxu0 0
        %2423 = vmatprep.subr.bf16.mxu0 0
        %2424 = vmatpush1.bf16.msra.mxu0 0
        %2425 = vmatprep.mubr.bf16.mxu0 0
        %2426 = vmatmul.mubr.bf16.gmra.mrb[0].mxu0 %v2269
        %v2427 = vpop.f32.mrb[0].mxu0
        %v2428 = vadd.f32 %v2306, %v2427
        %v2429 = vpop.f32.mrb[0].mxu0
        %v2430 = vadd.f32 %v2310, %v2429
        %v2431 = vpop.f32.mrb[0].mxu0
        %v2432 = vadd.f32 %v2306, %v2431
        %v2433 = vpop.f32.mrb[0].mxu0
        %v2434 = vadd.f32 %v2310, %v2433
        %2435 = vmatprep.mubr.bf16.mxu0 0
        %2436 = vmatmul.mubr.bf16.gmra.mrb[0].mxu0 %v2270
        %v2437 = vpop.f32.mrb[0].mxu0
        %v2438 = vadd.f32 %v2306, %v2437
        %v2439 = vpop.f32.mrb[0].mxu0
        %v2440 = vadd.f32 %v2310, %v2439
        %v2441 = vpop.f32.mrb[0].mxu0
        %v2442 = vadd.f32 %v2306, %v2441
        %v2443 = vpop.f32.mrb[0].mxu0
        %v2444 = vadd.f32 %v2310, %v2443
        %2445 = vmatprep.mubr.bf16.mxu0 0
        %2446 = vmatmul.mubr.bf16.gmra.mrb[0].mxu0 %v2271
        %v2447 = vpop.f32.mrb[0].mxu0
        %v2448 = vadd.f32 %v2306, %v2447
        %v2449 = vpop.f32.mrb[0].mxu0
        %v2450 = vadd.f32 %v2310, %v2449
        %v2451 = vpop.f32.mrb[0].mxu0
        %v2452 = vadd.f32 %v2306, %v2451
        %v2453 = vpop.f32.mrb[0].mxu0
        %v2454 = vadd.f32 %v2310, %v2453
        %2455 = vmatprep.mubr.bf16.mxu0 0
        %2456 = vmatmul.mubr.bf16.gmra.mrb[0].mxu0 %v2272
        %v2457 = vpop.f32.mrb[0].mxu0
        %v2458 = vadd.f32 %v2306, %v2457
        %v2459 = vpop.f32.mrb[0].mxu0
        %v2460 = vadd.f32 %v2310, %v2459
        %v2461 = vpop.f32.mrb[0].mxu0
        %v2462 = vadd.f32 %v2306, %v2461
        %v2463 = vpop.f32.mrb[0].mxu0
        %v2464 = vadd.f32 %v2310, %v2463
        %2465 = vmatprep.mubr.bf16.mxu0 0
        %2466 = vmatmul.mubr.bf16.gmra.mrb[0].mxu0 %v2273
        %v2467 = vpop.f32.mrb[0].mxu0
        %v2468 = vadd.f32 %v2306, %v2467
        %v2469 = vpop.f32.mrb[0].mxu0
        %v2470 = vadd.f32 %v2310, %v2469
        %v2471 = vpop.f32.mrb[0].mxu0
        %v2472 = vadd.f32 %v2306, %v2471
        %v2473 = vpop.f32.mrb[0].mxu0
        %v2474 = vadd.f32 %v2310, %v2473
        %2475 = vmatprep.mubr.bf16.mxu0 0
        %2476 = vmatmul.mubr.bf16.gmra.mrb[0].mxu0 %v2274
        %v2477 = vpop.f32.mrb[0].mxu0
        %v2478 = vadd.f32 %v2306, %v2477
        %v2479 = vpop.f32.mrb[0].mxu0
        %v2480 = vadd.f32 %v2310, %v2479
        %v2481 = vpop.f32.mrb[0].mxu0
        %v2482 = vadd.f32 %v2306, %v2481
        %v2483 = vpop.f32.mrb[0].mxu0
        %v2484 = vadd.f32 %v2310, %v2483
        %2485 = vmatprep.mubr.bf16.mxu0 0
        %2486 = vmatmul.mubr.bf16.gmra.mrb[0].mxu0 %v2275
        %v2487 = vpop.f32.mrb[0].mxu0
        %v2488 = vadd.f32 %v2306, %v2487
        %v2489 = vpop.f32.mrb[0].mxu0
        %v2490 = vadd.f32 %v2310, %v2489
        %v2491 = vpop.f32.mrb[0].mxu0
        %v2492 = vadd.f32 %v2306, %v2491
        %v2493 = vpop.f32.mrb[0].mxu0
        %v2494 = vadd.f32 %v2310, %v2493
        %2495 = vmatprep.mubr.bf16.mxu0 0
        %2496 = vmatmul.mubr.bf16.gmra.mrb[0].mxu0 %v2276
        %v2497 = vpop.f32.mrb[0].mxu0
        %v2498 = vadd.f32 %v2306, %v2497
        %v2499 = vpop.f32.mrb[0].mxu0
        %v2500 = vadd.f32 %v2310, %v2499
        %v2501 = vpop.f32.mrb[0].mxu0
        %v2502 = vadd.f32 %v2306, %v2501
        %v2503 = vpop.f32.mrb[0].mxu0
        %v2504 = vadd.f32 %v2310, %v2503
        %2505 = vmatprep.mubr.bf16.mxu0 0
        %2506 = vmatmul.mubr.bf16.gmra.mrb[0].mxu0 %v2277
        %v2507 = vpop.f32.mrb[0].mxu0
        %v2508 = vadd.f32 %v2306, %v2507
        %v2509 = vpop.f32.mrb[0].mxu0
        %v2510 = vadd.f32 %v2310, %v2509
        %v2511 = vpop.f32.mrb[0].mxu0
        %v2512 = vadd.f32 %v2306, %v2511
        %v2513 = vpop.f32.mrb[0].mxu0
        %v2514 = vadd.f32 %v2310, %v2513
        %2515 = vmatprep.mubr.bf16.mxu0 0
        %2516 = vmatmul.mubr.bf16.gmra.mrb[0].mxu0 %v2278
        %v2517 = vpop.f32.mrb[0].mxu0
        %v2518 = vadd.f32 %v2306, %v2517
        %v2519 = vpop.f32.mrb[0].mxu0
        %v2520 = vadd.f32 %v2310, %v2519
        %v2521 = vpop.f32.mrb[0].mxu0
        %v2522 = vadd.f32 %v2306, %v2521
        %v2523 = vpop.f32.mrb[0].mxu0
        %v2524 = vadd.f32 %v2310, %v2523
        %2525 = vmatprep.mubr.bf16.mxu0 0
        %2526 = vmatmul.mubr.bf16.gmra.mrb[0].mxu0 %v2279
        %v2527 = vpop.f32.mrb[0].mxu0
        %v2528 = vadd.f32 %v2306, %v2527
        %v2529 = vpop.f32.mrb[0].mxu0
        %v2530 = vadd.f32 %v2310, %v2529
        %v2531 = vpop.f32.mrb[0].mxu0
        %v2532 = vadd.f32 %v2306, %v2531
        %v2533 = vpop.f32.mrb[0].mxu0
        %v2534 = vadd.f32 %v2310, %v2533
        %2535 = vmatprep.mubr.bf16.mxu0 0
        %2536 = vmatmul.mubr.bf16.gmra.mrb[0].mxu0 %v2280
        %v2537 = vpop.f32.mrb[0].mxu0
        %v2538 = vadd.f32 %v2306, %v2537
        %v2539 = vpop.f32.mrb[0].mxu0
        %v2540 = vadd.f32 %v2310, %v2539
        %v2541 = vpop.f32.mrb[0].mxu0
        %v2542 = vadd.f32 %v2306, %v2541
        %v2543 = vpop.f32.mrb[0].mxu0
        %v2544 = vadd.f32 %v2310, %v2543
        %2545 = vmatprep.mubr.bf16.mxu0 0
        %2546 = vmatmul.mubr.bf16.gmra.mrb[0].mxu0 %v2281
        %v2547 = vpop.f32.mrb[0].mxu0
        %v2548 = vadd.f32 %v2306, %v2547
        %v2549 = vpop.f32.mrb[0].mxu0
        %v2550 = vadd.f32 %v2310, %v2549
        %v2551 = vpop.f32.mrb[0].mxu0
        %v2552 = vadd.f32 %v2306, %v2551
        %v2553 = vpop.f32.mrb[0].mxu0
        %v2554 = vadd.f32 %v2310, %v2553
        %2555 = vmatprep.mubr.bf16.mxu0 0
        %2556 = vmatmul.mubr.bf16.gmra.mrb[0].mxu0 %v2282
        %v2557 = vpop.f32.mrb[0].mxu0
        %v2558 = vadd.f32 %v2306, %v2557
        %v2559 = vpop.f32.mrb[0].mxu0
        %v2560 = vadd.f32 %v2310, %v2559
        %v2561 = vpop.f32.mrb[0].mxu0
        %v2562 = vadd.f32 %v2306, %v2561
        %v2563 = vpop.f32.mrb[0].mxu0
        %v2564 = vadd.f32 %v2310, %v2563
        %2565 = vmatprep.mubr.bf16.mxu0 0
        %2566 = vmatmul.mubr.bf16.gmra.mrb[0].mxu0 %v2283
        %v2567 = vpop.f32.mrb[0].mxu0
        %v2568 = vadd.f32 %v2306, %v2567
        %v2569 = vpop.f32.mrb[0].mxu0
        %v2570 = vadd.f32 %v2310, %v2569
        %v2571 = vpop.f32.mrb[0].mxu0
        %v2572 = vadd.f32 %v2306, %v2571
        %v2573 = vpop.f32.mrb[0].mxu0
        %v2574 = vadd.f32 %v2310, %v2573
        %2575 = vmatprep.mubr.bf16.mxu0 0
        %2576 = vmatmul.mubr.bf16.gmra.mrb[0].mxu0 %v2284
        %v2577 = vpop.f32.mrb[0].mxu0
        %v2578 = vadd.f32 %v2306, %v2577
        %v2579 = vpop.f32.mrb[0].mxu0
        %v2580 = vadd.f32 %v2310, %v2579
        %v2581 = vpop.f32.mrb[0].mxu0
        %v2582 = vadd.f32 %v2306, %v2581
        %v2583 = vpop.f32.mrb[0].mxu0
        %v2584 = vadd.f32 %v2310, %v2583
        %2585 = vdwg.mxu0
        %v2586 = vmax.f32 %v2428, 0.0
        %v2587 = vmax.f32 %v2430, 0.0
        %v2588 = vmax.f32 %v2432, 0.0
        %v2589 = vmax.f32 %v2434, 0.0
        %v2590 = vmax.f32 %v2438, 0.0
        %v2591 = vmax.f32 %v2440, 0.0
        %v2592 = vmax.f32 %v2442, 0.0
        %v2593 = vmax.f32 %v2444, 0.0
        %v2594 = vmax.f32 %v2448, 0.0
        %v2595 = vmax.f32 %v2450, 0.0
        %v2596 = vmax.f32 %v2452, 0.0
        %v2597 = vmax.f32 %v2454, 0.0
        %v2598 = vmax.f32 %v2458, 0.0
        %v2599 = vmax.f32 %v2460, 0.0
        %v2600 = vmax.f32 %v2462, 0.0
        %v2601 = vmax.f32 %v2464, 0.0
        %v2602 = vmax.f32 %v2468, 0.0
        %v2603 = vmax.f32 %v2470, 0.0
        %v2604 = vmax.f32 %v2472, 0.0
        %v2605 = vmax.f32 %v2474, 0.0
        %v2606 = vmax.f32 %v2478, 0.0
        %v2607 = vmax.f32 %v2480, 0.0
        %v2608 = vmax.f32 %v2482, 0.0
        %v2609 = vmax.f32 %v2484, 0.0
        %v2610 = vmax.f32 %v2488, 0.0
        %v2611 = vmax.f32 %v2490, 0.0
        %v2612 = vmax.f32 %v2492, 0.0
        %v2613 = vmax.f32 %v2494, 0.0
        %v2614 = vmax.f32 %v2498, 0.0
        %v2615 = vmax.f32 %v2500, 0.0
        %v2616 = vmax.f32 %v2502, 0.0
        %v2617 = vmax.f32 %v2504, 0.0
        %v2618 = vmax.f32 %v2508, 0.0
        %v2619 = vmax.f32 %v2510, 0.0
        %v2620 = vmax.f32 %v2512, 0.0
        %v2621 = vmax.f32 %v2514, 0.0
        %v2622 = vmax.f32 %v2518, 0.0
        %v2623 = vmax.f32 %v2520, 0.0
        %v2624 = vmax.f32 %v2522, 0.0
        %v2625 = vmax.f32 %v2524, 0.0
        %v2626 = vmax.f32 %v2528, 0.0
        %v2627 = vmax.f32 %v2530, 0.0
        %v2628 = vmax.f32 %v2532, 0.0
        %v2629 = vmax.f32 %v2534, 0.0
        %v2630 = vmax.f32 %v2538, 0.0
        %v2631 = vmax.f32 %v2540, 0.0
        %v2632 = vmax.f32 %v2542, 0.0
        %v2633 = vmax.f32 %v2544, 0.0
        %v2634 = vmax.f32 %v2548, 0.0
        %v2635 = vmax.f32 %v2550, 0.0
        %v2636 = vmax.f32 %v2552, 0.0
        %v2637 = vmax.f32 %v2554, 0.0
        %v2638 = vmax.f32 %v2558, 0.0
        %v2639 = vmax.f32 %v2560, 0.0
        %v2640 = vmax.f32 %v2562, 0.0
        %v2641 = vmax.f32 %v2564, 0.0
        %v2642 = vmax.f32 %v2568, 0.0
        %v2643 = vmax.f32 %v2570, 0.0
        %v2644 = vmax.f32 %v2572, 0.0
        %v2645 = vmax.f32 %v2574, 0.0
        %v2646 = vmax.f32 %v2578, 0.0
        %v2647 = vmax.f32 %v2580, 0.0
        %v2648 = vmax.f32 %v2582, 0.0
        %v2649 = vmax.f32 %v2584, 0.0
        %v2650 = vpack.c.bf16 %v2588, %v2586
        %v2651 = vpack.c.bf16 %v2589, %v2587
        %v2652 = vpack.c.bf16 %v2592, %v2590
        %v2653 = vpack.c.bf16 %v2593, %v2591
        %v2654 = vpack.c.bf16 %v2596, %v2594
        %v2655 = vpack.c.bf16 %v2597, %v2595
        %v2656 = vpack.c.bf16 %v2600, %v2598
        %v2657 = vpack.c.bf16 %v2601, %v2599
        %v2658 = vpack.c.bf16 %v2604, %v2602
        %v2659 = vpack.c.bf16 %v2605, %v2603
        %v2660 = vpack.c.bf16 %v2608, %v2606
        %v2661 = vpack.c.bf16 %v2609, %v2607
        %v2662 = vpack.c.bf16 %v2612, %v2610
        %v2663 = vpack.c.bf16 %v2613, %v2611
        %v2664 = vpack.c.bf16 %v2616, %v2614
        %v2665 = vpack.c.bf16 %v2617, %v2615
        %v2666 = vpack.c.bf16 %v2620, %v2618
        %v2667 = vpack.c.bf16 %v2621, %v2619
        %v2668 = vpack.c.bf16 %v2624, %v2622
        %v2669 = vpack.c.bf16 %v2625, %v2623
        %v2670 = vpack.c.bf16 %v2628, %v2626
        %v2671 = vpack.c.bf16 %v2629, %v2627
        %v2672 = vpack.c.bf16 %v2632, %v2630
        %v2673 = vpack.c.bf16 %v2633, %v2631
        %v2674 = vpack.c.bf16 %v2636, %v2634
        %v2675 = vpack.c.bf16 %v2637, %v2635
        %v2676 = vpack.c.bf16 %v2640, %v2638
        %v2677 = vpack.c.bf16 %v2641, %v2639
        %v2678 = vpack.c.bf16 %v2644, %v2642
        %v2679 = vpack.c.bf16 %v2645, %v2643
        %v2680 = vpack.c.bf16 %v2648, %v2646
        %v2681 = vpack.c.bf16 %v2649, %v2647
        %v2714 = vunpack.c.l.b16 %v2650
        %v2715 = vunpack.c.l.b16 %v2651
        %v2716 = vunpack.c.h.b16 %v2650
        %v2717 = vunpack.c.h.b16 %v2651
        %v2718 = vunpack.c.l.b16 %v2652
        %v2719 = vunpack.c.l.b16 %v2653
        %v2720 = vunpack.c.h.b16 %v2652
        %v2721 = vunpack.c.h.b16 %v2653
        %v2722 = vunpack.c.l.b16 %v2654
        %v2723 = vunpack.c.l.b16 %v2655
        %v2724 = vunpack.c.h.b16 %v2654
        %v2725 = vunpack.c.h.b16 %v2655
        %v2726 = vunpack.c.l.b16 %v2656
        %v2727 = vunpack.c.l.b16 %v2657
        %v2728 = vunpack.c.h.b16 %v2656
        %v2729 = vunpack.c.h.b16 %v2657
        %v2730 = vunpack.c.l.b16 %v2658
        %v2731 = vunpack.c.l.b16 %v2659
        %v2732 = vunpack.c.h.b16 %v2658
        %v2733 = vunpack.c.h.b16 %v2659
        %v2734 = vunpack.c.l.b16 %v2660
        %v2735 = vunpack.c.l.b16 %v2661
        %v2736 = vunpack.c.h.b16 %v2660
        %v2737 = vunpack.c.h.b16 %v2661
        %v2738 = vunpack.c.l.b16 %v2662
        %v2739 = vunpack.c.l.b16 %v2663
        %v2740 = vunpack.c.h.b16 %v2662
        %v2741 = vunpack.c.h.b16 %v2663
        %v2742 = vunpack.c.l.b16 %v2664
        %v2743 = vunpack.c.l.b16 %v2665
        %v2744 = vunpack.c.h.b16 %v2664
        %v2745 = vunpack.c.h.b16 %v2665
        %v2746 = vunpack.c.l.b16 %v2666
        %v2747 = vunpack.c.l.b16 %v2667
        %v2748 = vunpack.c.h.b16 %v2666
        %v2749 = vunpack.c.h.b16 %v2667
        %v2750 = vunpack.c.l.b16 %v2668
        %v2751 = vunpack.c.l.b16 %v2669
        %v2752 = vunpack.c.h.b16 %v2668
        %v2753 = vunpack.c.h.b16 %v2669
        %v2754 = vunpack.c.l.b16 %v2670
        %v2755 = vunpack.c.l.b16 %v2671
        %v2756 = vunpack.c.h.b16 %v2670
        %v2757 = vunpack.c.h.b16 %v2671
        %v2758 = vunpack.c.l.b16 %v2672
        %v2759 = vunpack.c.l.b16 %v2673
        %v2760 = vunpack.c.h.b16 %v2672
        %v2761 = vunpack.c.h.b16 %v2673
        %v2762 = vunpack.c.l.b16 %v2674
        %v2763 = vunpack.c.l.b16 %v2675
        %v2764 = vunpack.c.h.b16 %v2674
        %v2765 = vunpack.c.h.b16 %v2675
        %v2766 = vunpack.c.l.b16 %v2676
        %v2767 = vunpack.c.l.b16 %v2677
        %v2768 = vunpack.c.h.b16 %v2676
        %v2769 = vunpack.c.h.b16 %v2677
        %v2770 = vunpack.c.l.b16 %v2678
        %v2771 = vunpack.c.l.b16 %v2679
        %v2772 = vunpack.c.h.b16 %v2678
        %v2773 = vunpack.c.h.b16 %v2679
        %v2774 = vunpack.c.l.b16 %v2680
        %v2775 = vunpack.c.l.b16 %v2681
        %v2776 = vunpack.c.h.b16 %v2680
        %v2777 = vunpack.c.h.b16 %v2681
        %v2778 = vpack.c.b16 %v2715, %v2714
        %v2779 = vpack.c.b16 %v2717, %v2716
        %v2780 = vpack.c.b16 %v2719, %v2718
        %v2781 = vpack.c.b16 %v2721, %v2720
        %v2782 = vpack.c.b16 %v2723, %v2722
        %v2783 = vpack.c.b16 %v2725, %v2724
        %v2784 = vpack.c.b16 %v2727, %v2726
        %v2785 = vpack.c.b16 %v2729, %v2728
        %v2786 = vpack.c.b16 %v2731, %v2730
        %v2787 = vpack.c.b16 %v2733, %v2732
        %v2788 = vpack.c.b16 %v2735, %v2734
        %v2789 = vpack.c.b16 %v2737, %v2736
        %v2790 = vpack.c.b16 %v2739, %v2738
        %v2791 = vpack.c.b16 %v2741, %v2740
        %v2792 = vpack.c.b16 %v2743, %v2742
        %v2793 = vpack.c.b16 %v2745, %v2744
        %v2794 = vpack.c.b16 %v2747, %v2746
        %v2795 = vpack.c.b16 %v2749, %v2748
        %v2796 = vpack.c.b16 %v2751, %v2750
        %v2797 = vpack.c.b16 %v2753, %v2752
        %v2798 = vpack.c.b16 %v2755, %v2754
        %v2799 = vpack.c.b16 %v2757, %v2756
        %v2800 = vpack.c.b16 %v2759, %v2758
        %v2801 = vpack.c.b16 %v2761, %v2760
        %v2802 = vpack.c.b16 %v2763, %v2762
        %v2803 = vpack.c.b16 %v2765, %v2764
        %v2804 = vpack.c.b16 %v2767, %v2766
        %v2805 = vpack.c.b16 %v2769, %v2768
        %v2806 = vpack.c.b16 %v2771, %v2770
        %v2807 = vpack.c.b16 %v2773, %v2772
        %v2808 = vpack.c.b16 %v2775, %v2774
        %v2809 = vpack.c.b16 %v2777, %v2776
        %2842 = vst [vmem:[%s559] sm:$0xff] %v2778
        %2843 = vst [vmem:[%s559 + $0x8] sm:$0xff] %v2779
        %2844 = vst [vmem:[%s559 + $0x10] sm:$0xff] %v2780
        %2845 = vst [vmem:[%s559 + $0x18] sm:$0xff] %v2781
        %2846 = vst [vmem:[%s559 + $0x20] sm:$0xff] %v2782
        %2847 = vst [vmem:[%s559 + $0x28] sm:$0xff] %v2783
        %2848 = vst [vmem:[%s559 + $0x30] sm:$0xff] %v2784
        %2849 = vst [vmem:[%s559 + $0x38] sm:$0xff] %v2785
        %2850 = vst [vmem:[%s559 + $0x40] sm:$0xff] %v2786
        %2851 = vst [vmem:[%s559 + $0x48] sm:$0xff] %v2787
        %2852 = vst [vmem:[%s559 + $0x50] sm:$0xff] %v2788
        %2853 = vst [vmem:[%s559 + $0x58] sm:$0xff] %v2789
        %2854 = vst [vmem:[%s559 + $0x60] sm:$0xff] %v2790
        %2855 = vst [vmem:[%s559 + $0x68] sm:$0xff] %v2791
        %2856 = vst [vmem:[%s559 + $0x70] sm:$0xff] %v2792
        %2857 = vst [vmem:[%s559 + $0x78] sm:$0xff] %v2793
        %2858 = vst [vmem:[%s559 + $0x80] sm:$0xff] %v2794
        %2859 = vst [vmem:[%s559 + $0x88] sm:$0xff] %v2795
        %2860 = vst [vmem:[%s559 + $0x90] sm:$0xff] %v2796
        %2861 = vst [vmem:[%s559 + $0x98] sm:$0xff] %v2797
        %2862 = vst [vmem:[%s559 + $0xa0] sm:$0xff] %v2798
        %2863 = vst [vmem:[%s559 + $0xa8] sm:$0xff] %v2799
        %2864 = vst [vmem:[%s559 + $0xb0] sm:$0xff] %v2800
        %2865 = vst [vmem:[%s559 + $0xb8] sm:$0xff] %v2801
        %2866 = vst [vmem:[%s559 + $0xc0] sm:$0xff] %v2802
        %2867 = vst [vmem:[%s559 + $0xc8] sm:$0xff] %v2803
        %2868 = vst [vmem:[%s559 + $0xd0] sm:$0xff] %v2804
        %2869 = vst [vmem:[%s559 + $0xd8] sm:$0xff] %v2805
        %2870 = vst [vmem:[%s559 + $0xe0] sm:$0xff] %v2806
        %2871 = vst [vmem:[%s559 + $0xe8] sm:$0xff] %v2807
        %2872 = vst [vmem:[%s559 + $0xf0] sm:$0xff] %v2808
        %2873 = vst [vmem:[%s559 + $0xf8] sm:$0xff] %v2809
        %2874 = vst [vmem:[%s566] sm:$0xff] %v1575
        %2875 = vst [vmem:[%s566 + $0x8] sm:$0xff] %v1578
        %2876 = vst [vmem:[%s566 + $0x10] sm:$0xff] %v1583
        %2877 = vst [vmem:[%s566 + $0x18] sm:$0xff] %v1586
        %2878 = vst [vmem:[%s566 + $0x20] sm:$0xff] %v1591
        %2879 = vst [vmem:[%s566 + $0x28] sm:$0xff] %v1594
        %2880 = vst [vmem:[%s566 + $0x30] sm:$0xff] %v1599
        %2881 = vst [vmem:[%s566 + $0x38] sm:$0xff] %v1602
        %2882 = vst [vmem:[%s566 + $0x40] sm:$0xff] %v1607
        %2883 = vst [vmem:[%s566 + $0x48] sm:$0xff] %v1610
        %2884 = vst [vmem:[%s566 + $0x50] sm:$0xff] %v1615
        %2885 = vst [vmem:[%s566 + $0x58] sm:$0xff] %v1618
        %2886 = vst [vmem:[%s566 + $0x60] sm:$0xff] %v1623
        %2887 = vst [vmem:[%s566 + $0x68] sm:$0xff] %v1626
        %2888 = vst [vmem:[%s566 + $0x70] sm:$0xff] %v1631
        %2889 = vst [vmem:[%s566 + $0x78] sm:$0xff] %v1634
        %2890 = vst [vmem:[%s566 + $0x80] sm:$0xff] %v1639
        %2891 = vst [vmem:[%s566 + $0x88] sm:$0xff] %v1642
        %2892 = vst [vmem:[%s566 + $0x90] sm:$0xff] %v1647
        %2893 = vst [vmem:[%s566 + $0x98] sm:$0xff] %v1650
        %2894 = vst [vmem:[%s566 + $0xa0] sm:$0xff] %v1655
        %2895 = vst [vmem:[%s566 + $0xa8] sm:$0xff] %v1658
        %2896 = vst [vmem:[%s566 + $0xb0] sm:$0xff] %v1663
        %2897 = vst [vmem:[%s566 + $0xb8] sm:$0xff] %v1666
        %2898 = vst [vmem:[%s566 + $0xc0] sm:$0xff] %v1671
        %2899 = vst [vmem:[%s566 + $0xc8] sm:$0xff] %v1674
        %2900 = vst [vmem:[%s566 + $0xd0] sm:$0xff] %v1679
        %2901 = vst [vmem:[%s566 + $0xd8] sm:$0xff] %v1682
        %2902 = vst [vmem:[%s566 + $0xe0] sm:$0xff] %v1687
        %2903 = vst [vmem:[%s566 + $0xe8] sm:$0xff] %v1690
        %2904 = vst [vmem:[%s566 + $0xf0] sm:$0xff] %v1695
        %2905 = vst [vmem:[%s566 + $0xf8] sm:$0xff] %v1698
        %s2906 = sand.u32 %s309, 1
        %s2907 = scalar_lea.sflag [#allocation4], %s2906
        %s2908 = sand.u32 %s309, 1
        %s2909 = smul.addr %s2908, 256
        %s2910 = scalar_lea.vmem [#allocation13], %s2909
        %s2911 = sand.u32 %s335, 1
        %s2912 = scalar_lea.sflag [#allocation15], %s2911
        %s2913 = sand.u32 %s335, 1
        %s2914 = smul.addr %s2913, 256
        %s2915 = scalar_lea.vmem [#allocation14], %s2914
        // Predicated region
        $region93: #{tpu_custom_call.1} parent=67 // pred_check
          %p2916 = pneg %p319
        $region94: #{tpu_custom_call.1} parent=67 // pred_check_branch
          %2918 = sbr.rel (%p2916) target = $region96
        $region95: #{tpu_custom_call.1} parent=67 // pred_region
          %s2919 = smul.u32 32, %s39
          %s2921 = ssub.s32 4096, 4096
          %2922 = vsyncadd %s2907, %s2921
          %s2923 = smul.addr %s2919, 2
          %s2924 = smul.addr %s2923, 64
          %s2925 = scalar_lea.hbm %s12, %s2924
          %s2926 = sshll.u32 %s2910, 4
          %s2927 = int_to_ptr.vmem [resolvable:$true] %s2926
          %2932 = dma.vmem_to_hbm [thread:$0]  %s2927, 4096, %s2925, %s2907, 128, 128, 8
        $region96: #{tpu_custom_call.1} parent=67 // pred_fallthru
          _
        // Predicated region
        $region97: #{tpu_custom_call.1} parent=67 // pred_check
          %p2933 = pneg %p345
        $region98: #{tpu_custom_call.1} parent=67 // pred_check_branch
          %2935 = sbr.rel (%p2933) target = $region100
        $region99: #{tpu_custom_call.1} parent=67 // pred_region
          %s2936 = smul.u32 32, %s39
          %s2938 = ssub.s32 4096, 4096
          %2939 = vsyncadd %s2912, %s2938
          %s2940 = smul.addr %s2936, 128
          %s2941 = scalar_lea.hbm %s13, %s2940
          %s2942 = sshll.u32 %s2915, 4
          %s2943 = int_to_ptr.vmem [resolvable:$true] %s2942
          %2948 = dma.vmem_to_hbm [thread:$0]  %s2943, 4096, %s2941, %s2912, 128, 128, 8
        $region100: #{tpu_custom_call.1} parent=67 // pred_fallthru
          _
      $region68: #{tpu_custom_call.1} parent=5 // pred_fallthru
        _
      %p2949 = scmp.le.s32.totalorder 2, %s34
      // Predicated region
      $region101: #{tpu_custom_call.1} parent=5 // pred_check
        %p2950 = pneg %p2949
      $region102: #{tpu_custom_call.1} parent=5 // pred_check_branch
        %2952 = sbr.rel (%p2950) target = $region104
      $region103: #{tpu_custom_call.1} parent=5 // pred_region
        %s2953 = ssub.s32 %s34, 2
        // Predicated region
        $region105: #{tpu_custom_call.1} parent=103 // pred_check
          %p2954 = pneg %p325
        $region106: #{tpu_custom_call.1} parent=103 // pred_check_branch
          %2956 = sbr.rel (%p2954) target = $region108
        $region107: #{tpu_custom_call.1} parent=103 // pred_region
          %s2957 = sand.u32 %s310, 1
          %s2958 = scalar_lea.sflag [#allocation4], %s2957
          %s2959 = sand.u32 %s310, 1
          %s2960 = smul.addr %s2959, 256
          %s2961 = scalar_lea.vmem [#allocation13], %s2960
          %2962 = dma.done %s2958, 4096
        $region108: #{tpu_custom_call.1} parent=103 // pred_fallthru
          _
        // Predicated region
        $region109: #{tpu_custom_call.1} parent=103 // pred_check
          %p2963 = pneg %p351
        $region110: #{tpu_custom_call.1} parent=103 // pred_check_branch
          %2965 = sbr.rel (%p2963) target = $region112
        $region111: #{tpu_custom_call.1} parent=103 // pred_region
          %s2966 = sand.u32 %s336, 1
          %s2967 = scalar_lea.sflag [#allocation15], %s2966
          %s2968 = sand.u32 %s336, 1
          %s2969 = smul.addr %s2968, 256
          %s2970 = scalar_lea.vmem [#allocation14], %s2969
          %2971 = dma.done %s2967, 4096
        $region112: #{tpu_custom_call.1} parent=103 // pred_fallthru
          _
      $region104: #{tpu_custom_call.1} parent=5 // pred_fallthru
        _
    $region6: #{tpu_custom_call.1} parent=1 // loop_footer
      %s38 = sadd.s32 1, %s34
    $region7: #{tpu_custom_call.1} parent=1 // loop_footer_branch
      %33 = sbr.rel target = $region3
    $region8: #{tpu_custom_call.1} parent=1 // loop_exit
      _
    %2972 = vsyncpa [#allocation3], 1
    %s2973 = scalar_lea.sflag [#allocation3], 1
    %2974 = vsyncpa %s2973, 1
    %2975 = vsyncpa [#allocation6], 1
    %s2976 = scalar_lea.sflag [#allocation6], 1
    %2977 = vsyncpa %s2976, 1
    %2978 = vsyncpa [#allocation9], 1
    %2979 = vsyncpa [#allocation12], 1
    %2980 = vsyncpa [#allocation4], 1
    %s2981 = scalar_lea.sflag [#allocation4], 1
    %2982 = vsyncpa %s2981, 1
    %2983 = vsyncpa [#allocation15], 1
    %s2984 = scalar_lea.sflag [#allocation15], 1
    %2985 = vsyncpa %s2984, 1

</llo_original>
